<compile_context>
chip_gen: v7x
topology: tpu7x:2x2x1
jax: 0.10.0
libtpu: 0.0.40
codegen_flags: <defaults>
</compile_context>

<pallas_src>
import functools

import jax
import jax.numpy as jnp
from jax import lax
from jax.experimental import pallas as pl
from jax.experimental.pallas import tpu as pltpu


def bilstm_pool_fc_kernel(x_ref, len_ref,
                          wih_ref, whh_ref, b_ref,
                          wfc_ref, bfc_ref,
                          out_ref,
                          gx_ref,
                          *, hidden_size, split_recurrence):
    """Bidirectional LSTM recurrence + masked mean-pool over time + final Linear.

    x_ref:    (T, Bt, E)   embedded tokens, one batch tile (time-major)
    len_ref:  (Bt, 1)      int32 valid sequence lengths
    wih_ref:  (E, 8H)      [fwd | bwd] input->gate weights
    whh_ref:  (2H, 8H) block-diag (fused) OR (2, H, 4H) stacked (split)
    b_ref:    (1, 8H)      combined biases
    wfc_ref:  (H, NP), bfc_ref: (1, NP)   lane-dense (NP = padded num_output)
    out_ref:  (Bt, NP)
    gx_ref:   (T, Bt, 8H)  VMEM scratch: precomputed input projections (f32 or bf16)
    """
    T, Bt, E = x_ref.shape
    H = hidden_size
    H4 = 4 * H
    H8 = 8 * H

    # ---- hoisted: input projections for both directions as ONE big MXU matmul ----
    x_flat = x_ref[...].reshape(T * Bt, E)
    wih = wih_ref[...]
    if gx_ref.dtype == jnp.bfloat16:          # native bf16 MXU path, halves gx VMEM
        x_flat = x_flat.astype(jnp.bfloat16)
        wih = wih.astype(jnp.bfloat16)
    gx = (jnp.dot(x_flat, wih, preferred_element_type=jnp.float32) + b_ref[...])
    gx_ref[...] = gx.reshape(T, Bt, H8).astype(gx_ref.dtype)

    lens = len_ref[...]                       # (Bt, 1) int32, held in registers

    if split_recurrence:
        whh_f = whh_ref[0]                    # (H, 4H)
        whh_b = whh_ref[1]                    # (H, 4H)
    else:
        whh = whh_ref[...]                    # (2H, 8H), block diagonal

    def gates(pre):
        # pre: (Bt, 4H) pre-activations, PyTorch gate order i, f, g, o
        if H >= 128:
            # gates are vreg-aligned: only run EUP on the ranges actually used
            s_if = jax.nn.sigmoid(pre[:, 0:2 * H])
            i, f = s_if[:, 0:H], s_if[:, H:2 * H]
            g = jnp.tanh(pre[:, 2 * H:3 * H])
            o = jax.nn.sigmoid(pre[:, 3 * H:4 * H])
        else:
            # small H: full-slab EUP passes then slice (one vreg per pass)
            sg = jax.nn.sigmoid(pre)
            th = jnp.tanh(pre)
            i, f, o = sg[:, 0:H], sg[:, H:2 * H], sg[:, 3 * H:4 * H]
            g = th[:, 2 * H:3 * H]
        return i, f, g, o

    def body(t, carry):
        h_f, h_b, c_f, c_b, acc = carry
        tb = T - 1 - t

        if split_recurrence:
            rec_f = jnp.dot(h_f, whh_f, preferred_element_type=jnp.float32)
            rec_b = jnp.dot(h_b, whh_b, preferred_element_type=jnp.float32)
        else:
            h_cat = jnp.concatenate([h_f, h_b], axis=1)            # (Bt, 2H)
            rec = jnp.dot(h_cat, whh, preferred_element_type=jnp.float32)
            rec_f, rec_b = rec[:, 0:H4], rec[:, H4:H8]

        # ref-level slices: only the needed 4H half of each gx row is loaded
        g_f = rec_f + gx_ref[t, :, 0:H4].astype(jnp.float32)        # forward gates
        g_b = rec_b + gx_ref[tb, :, H4:H8].astype(jnp.float32)      # backward gates

        i_f, f_f, gg_f, o_f = gates(g_f)
        i_b, f_b, gg_b, o_b = gates(g_b)

        c_f = f_f * c_f + i_f * gg_f
        h_f = o_f * jnp.tanh(c_f)

        c_b_raw = f_b * c_b + i_b * gg_b
        h_b_raw = o_b * jnp.tanh(c_b_raw)

        # validity masks computed on the fly (no per-step VMEM reloads)
        m_f = (t < lens).astype(jnp.float32)                        # (Bt, 1)
        m_b = (tb < lens).astype(jnp.float32)                       # (Bt, 1)

        # packed-sequence semantics: reverse direction restarts from zero state at
        # t = len-1 for each sequence; padded positions stay zero.
        h_b = m_b * h_b_raw
        c_b = m_b * c_b_raw

        acc = acc + m_f * h_f + h_b       # fwd + bwd hidden sum over valid timesteps
        return h_f, h_b, c_f, c_b, acc

    zH = jnp.zeros((Bt, H), jnp.float32)
    init = (zH, zH, zH, zH, zH)
    unroll = T if T <= 16 else 4          # bounded unroll: serial chain, keep code small
    _, _, _, _, acc = lax.fori_loop(0, T, body, init, unroll=unroll)

    # mean over valid timesteps (guarded against len == 0); true divide for exact
    # parity with the reference.
    lens_f = jnp.maximum(lens.astype(jnp.float32), 1.0)             # (Bt, 1)
    pooled = acc / lens_f

    out_ref[...] = (jnp.dot(pooled, wfc_ref[...], preferred_element_type=jnp.float32)
                    + bfc_ref[...])


def _resident_spec(shape, index_map):
    """BlockSpec for weights whose block index never changes.

    Single-buffered (pl.Buffered(1)) so the pipeline does not allocate a useless
    second VMEM copy; falls back to the default spec if the running JAX version
    does not accept the pipeline_mode kwarg.
    """
    if hasattr(pl, "Buffered"):
        try:
            return pl.BlockSpec(shape, index_map, pipeline_mode=pl.Buffered(1))
        except TypeError:
            pass
    return pl.BlockSpec(shape, index_map)


def _choose_batch_tile(B, T, E, H, gx_itemsize, vmem_budget=48 * 1024 * 1024):
    """Largest batch tile (multiple of 8, dividing B) whose per-tile VMEM footprint
    fits the budget; prefer >= 2 grid programs when B is large enough so the
    'parallel' axis can shard across both v7x TensorCores."""
    def tile_bytes(bt):
        return (T * bt * 8 * H * gx_itemsize        # gx scratch
                + 2 * T * bt * E * 4                # double-buffered x
                + 2 * bt * 128 * 4 + 2 * bt * 4)    # out + lens (approx)

    cands = [bt for bt in range(8, min(B, 256) + 1, 8)
             if B % bt == 0 and tile_bytes(bt) <= vmem_budget]
    if not cands:
        return B            # tiny / non-8-aligned batch: single full-extent tile
    bt = max(cands)
    if B // bt < 2:
        halved = [c for c in cands if B // c >= 2]
        if halved and max(halved) >= 64:
            bt = max(halved)   # keep both TensorCores busy without tiny tiles
    return bt


def _vmem_limit_bytes(T, Bt, E, H, NP, gx_itemsize, split_rec):
    whh_elems = (8 * H * H) if split_rec else (16 * H * H)
    weights = E * 8 * H + whh_elems + 8 * H + H * NP + NP           # single-buffered
    total = (T * Bt * 8 * H * gx_itemsize        # gx scratch
             + 2 * T * Bt * E * 4                # double-buffered x
             + weights * 4
             + 2 * Bt * NP * 4                   # double-buffered out
             + 2 * Bt * 4)                       # lens
    limit = int(total * 1.5) + (2 << 20)         # headroom for compiler scratch
    return max(min(limit, 100 * 1024 * 1024), 32 * 1024 * 1024)


def init_params(key, vocab_size, embed_size, hidden_size, num_output):
    """Deterministic parameter init mirroring the PyTorch module's shapes."""
    ks = jax.random.split(key, 12)
    H, E = hidden_size, embed_size
    k_rnn = 1.0 / jnp.sqrt(jnp.float32(H))
    k_fc = 1.0 / jnp.sqrt(jnp.float32(H))

    def u(k, shape, scale):
        return jax.random.uniform(k, shape, jnp.float32, minval=-scale, maxval=scale)

    embedding = jax.random.normal(ks[0], (vocab_size, E), jnp.float32)
    embedding = embedding.at[0].set(0.0)  # padding_idx = 0

    return {
        "embedding": embedding,
        # forward direction (weight_ih_l0 / weight_hh_l0, transposed)
        "wih_f": u(ks[1], (E, 4 * H), k_rnn),
        "whh_f": u(ks[2], (H, 4 * H), k_rnn),
        "b_f": (u(ks[3], (1, 4 * H), k_rnn) + u(ks[4], (1, 4 * H), k_rnn)),
        # backward direction (..._reverse)
        "wih_b": u(ks[5], (E, 4 * H), k_rnn),
        "whh_b": u(ks[6], (H, 4 * H), k_rnn),
        "b_b": (u(ks[7], (1, 4 * H), k_rnn) + u(ks[8], (1, 4 * H), k_rnn)),
        # fc: nn.Linear(hidden_size, num_output); stored transposed (H, num_output)
        "wfc": u(ks[9], (H, num_output), k_fc),
        "bfc": u(ks[10], (1, num_output), k_fc),
    }


@functools.partial(jax.jit, static_argnames=("num_output", "use_bf16_gx"))
def rnn_forward(tokens, seq_lengths, params, num_output, use_bf16_gx=False):
    """Wrapper: embedding gather (glue) + Pallas BiLSTM / mean-pool / fc kernel."""
    B, T = tokens.shape
    E = params["wih_f"].shape[0]
    H = params["whh_f"].shape[0]

    emb = params["embedding"][tokens]                        # (B, T, E) gather (glue)
    x = jnp.transpose(emb, (1, 0, 2)).astype(jnp.float32)    # (T, B, E) time-major
    lens = seq_lengths.reshape(B, 1).astype(jnp.int32)

    # --- pack weights (once per trace) ---
    wih_big = jnp.concatenate([params["wih_f"], params["wih_b"]], axis=1)    # (E, 8H)
    b_big = jnp.concatenate([params["b_f"], params["b_b"]], axis=1)          # (1, 8H)

    split_rec = H >= 128
    if split_rec:
        whh_pack = jnp.stack([params["whh_f"], params["whh_b"]], axis=0)     # (2, H, 4H)
        whh_spec_shape = (2, H, 4 * H)
        whh_index_map = lambda b: (0, 0, 0)
    else:
        whh_pack = jnp.zeros((2 * H, 8 * H), jnp.float32)
        whh_pack = whh_pack.at[:H, :4 * H].set(params["whh_f"])
        whh_pack = whh_pack.at[H:, 4 * H:].set(params["whh_b"])
        whh_spec_shape = (2 * H, 8 * H)
        whh_index_map = lambda b: (0, 0)

    # lane-dense output: pad fc to a multiple of 128 lanes, slice after the call
    NP = max(128, ((num_output + 127) // 128) * 128)
    wfc = jnp.zeros((H, NP), jnp.float32).at[:, :num_output].set(params["wfc"])
    bfc = jnp.zeros((1, NP), jnp.float32).at[:, :num_output].set(params["bfc"])

    gx_dtype = jnp.bfloat16 if use_bf16_gx else jnp.float32
    gx_itemsize = jnp.dtype(gx_dtype).itemsize

    B_TILE = _choose_batch_tile(B, T, E, H, gx_itemsize)
    assert B % B_TILE == 0, "batch must divide the batch tile"
    grid = (B // B_TILE,)

    kernel = functools.partial(bilstm_pool_fc_kernel,
                               hidden_size=H, split_recurrence=split_rec)

    out = pl.pallas_call(
        kernel,
        out_shape=jax.ShapeDtypeStruct((B, NP), jnp.float32),
        grid_spec=pltpu.PrefetchScalarGridSpec(
            num_scalar_prefetch=0,
            grid=grid,
            in_specs=[
                pl.BlockSpec((T, B_TILE, E), lambda b: (0, b, 0)),        # x
                pl.BlockSpec((B_TILE, 1), lambda b: (b, 0)),              # lens
                _resident_spec((E, 8 * H), lambda b: (0, 0)),             # wih_big
                _resident_spec(whh_spec_shape, whh_index_map),            # whh
                _resident_spec((1, 8 * H), lambda b: (0, 0)),             # b_big
                _resident_spec((H, NP), lambda b: (0, 0)),                # wfc (padded)
                _resident_spec((1, NP), lambda b: (0, 0)),                # bfc (padded)
            ],
            out_specs=pl.BlockSpec((B_TILE, NP), lambda b: (b, 0)),
            scratch_shapes=[
                pltpu.VMEM((T, B_TILE, 8 * H), gx_dtype),   # precomputed x-projections
            ]),
        compiler_params=pltpu.CompilerParams(
            dimension_semantics=("parallel",),
            vmem_limit_bytes=_vmem_limit_bytes(T, B_TILE, E, H, NP,
                                               gx_itemsize, split_rec)),
    )(x, lens, wih_big, whh_pack, b_big, wfc, bfc)

    return out[:, :num_output]


def ref_forward(tokens, seq_lengths, p, hidden_size):
    """Pure-JAX reference of the same forward pass (for correctness check)."""
    H = hidden_size
    emb = p["embedding"][tokens].astype(jnp.float32)   # (B, T, E)
    B, T, _ = emb.shape
    lens_f = seq_lengths.astype(jnp.float32)[:, None]

    def step(xt, h, c, wih, whh, b):
        gates = xt @ wih + h @ whh + b
        i = jax.nn.sigmoid(gates[:, :H])
        f = jax.nn.sigmoid(gates[:, H:2 * H])
        g = jnp.tanh(gates[:, 2 * H:3 * H])
        o = jax.nn.sigmoid(gates[:, 3 * H:])
        c = f * c + i * g
        return o * jnp.tanh(c), c

    hf = cf = hb = cb = jnp.zeros((B, H), jnp.float32)
    acc = jnp.zeros((B, H), jnp.float32)
    for t in range(T):
        hf, cf = step(emb[:, t], hf, cf, p["wih_f"], p["whh_f"], p["b_f"])
        acc = acc + (t < seq_lengths)[:, None].astype(jnp.float32) * hf
    for t in range(T - 1, -1, -1):
        hb_c, cb_c = step(emb[:, t], hb, cb, p["wih_b"], p["whh_b"], p["b_b"])
        m = (t < seq_lengths)[:, None].astype(jnp.float32)
        hb = m * hb_c
        cb = m * cb_c
        acc = acc + hb
    pooled = acc / lens_f
    return pooled @ p["wfc"] + p["bfc"]


if __name__ == "__main__":
    # small shapes consistent with the module's forward
    VOCAB, EMBED, HIDDEN, NUM_OUT = 50, 32, 32, 16
    B, T = 8, 8

    key = jax.random.PRNGKey(0)
    k_par, k_tok = jax.random.split(key)

    params = init_params(k_par, VOCAB, EMBED, HIDDEN, NUM_OUT)

    # lengths sorted descending (pack_padded_sequence with enforce_sorted=True)
    seq_lengths = jnp.array([8, 7, 6, 5, 5, 4, 3, 2], dtype=jnp.int32)
    tokens = jax.random.randint(k_tok, (B, T), 1, VOCAB, dtype=jnp.int32)
    valid = jnp.arange(T)[None, :] < seq_lengths[:, None]
    tokens = jnp.where(valid, tokens, 0)   # padded positions get padding_index=0

    out = rnn_forward(tokens, seq_lengths, params, NUM_OUT)
    out = jax.block_until_ready(out)

    ref = ref_forward(tokens, seq_lengths, params, HIDDEN)
    assert out.shape == (B, NUM_OUT), out.shape
    assert jnp.allclose(out, ref, atol=1e-4, rtol=1e-4), (
        "mismatch: max abs err = %e" % float(jnp.max(jnp.abs(out - ref))))

    print("KERNEL_OK")
</pallas_src>

<mosaic_0001>
module attributes {stable_mosaic.version = 11 : i64} {
  func.func @bilstm_pool_fc_kernel(%arg0: i32, %arg1: memref<8x8x32xf32, #tpu.memory_space<vmem>>, %arg2: memref<8x1xi32, #tpu.memory_space<vmem>>, %arg3: memref<32x256xf32, #tpu.memory_space<vmem>>, %arg4: memref<64x256xf32, #tpu.memory_space<vmem>>, %arg5: memref<1x256xf32, #tpu.memory_space<vmem>>, %arg6: memref<32x128xf32, #tpu.memory_space<vmem>>, %arg7: memref<1x128xf32, #tpu.memory_space<vmem>>, %arg8: memref<8x128xf32, #tpu.memory_space<vmem>>, %arg9: memref<8x8x256xf32, #tpu.memory_space<vmem>>) attributes {dimension_semantics = [#tpu.dimension_semantics<parallel>], iteration_bounds = array<i64: 1>, scalar_prefetch = 0 : i64, scratch_operands = 1 : i64, tpu.core_type = #tpu.core_type<tc>, window_params = [{transform_indices = @transform_0, window_bounds = array<i64: 8, 8, 32>}, {transform_indices = @transform_1, window_bounds = array<i64: 8, 1>}, {pipeline_mode = #tpu.pipeline_mode<synchronous>, transform_indices = @transform_2, window_bounds = array<i64: 32, 256>}, {pipeline_mode = #tpu.pipeline_mode<synchronous>, transform_indices = @transform_3, window_bounds = array<i64: 64, 256>}, {pipeline_mode = #tpu.pipeline_mode<synchronous>, transform_indices = @transform_4, window_bounds = array<i64: 1, 256>}, {pipeline_mode = #tpu.pipeline_mode<synchronous>, transform_indices = @transform_5, window_bounds = array<i64: 32, 128>}, {pipeline_mode = #tpu.pipeline_mode<synchronous>, transform_indices = @transform_6, window_bounds = array<i64: 1, 128>}, {transform_indices = @transform_7, window_bounds = array<i64: 8, 128>}]} {
    %c0 = arith.constant 0 : index
    %c0_0 = arith.constant 0 : index
    %c0_1 = arith.constant 0 : index
    %0 = vector.load %arg1[%c0, %c0_0, %c0_1] : memref<8x8x32xf32, #tpu.memory_space<vmem>>, vector<8x8x32xf32>
    %1 = vector.shape_cast %0 : vector<8x8x32xf32> to vector<64x32xf32>
    %c0_2 = arith.constant 0 : index
    %c0_3 = arith.constant 0 : index
    %2 = vector.load %arg3[%c0_2, %c0_3] : memref<32x256xf32, #tpu.memory_space<vmem>>, vector<32x256xf32>
    %cst = arith.constant dense<0.000000e+00> : vector<64x256xf32>
    %3 = tpu.matmul %1, %2, %cst {dimension_numbers = #tpu.dot_dimension_numbers<[1], [0], [0], [1], [0, 0, 1, 1], [], []>} : vector<64x32xf32>, vector<32x256xf32>, vector<64x256xf32> -> vector<64x256xf32>
    %c0_4 = arith.constant 0 : index
    %c0_5 = arith.constant 0 : index
    %4 = vector.load %arg5[%c0_4, %c0_5] : memref<1x256xf32, #tpu.memory_space<vmem>>, vector<1x256xf32>
    %5 = vector.broadcast %4 : vector<1x256xf32> to vector<64x256xf32>
    %6 = arith.addf %3, %5 : vector<64x256xf32>
    %7 = vector.shape_cast %6 : vector<64x256xf32> to vector<8x8x256xf32>
    %c0_6 = arith.constant 0 : index
    %c0_7 = arith.constant 0 : index
    %c0_8 = arith.constant 0 : index
    %8 = vector.load %arg9[%c0_6, %c0_7, %c0_8] : memref<8x8x256xf32, #tpu.memory_space<vmem>>, vector<8x8x256xf32>
    tpu.vector_store %arg9[%c0_6, %c0_7, %c0_8], %7 {strides = array<i32>} : memref<8x8x256xf32, #tpu.memory_space<vmem>>, vector<8x8x256xf32>,
    %c0_9 = arith.constant 0 : index
    %c0_10 = arith.constant 0 : index
    %9 = vector.load %arg2[%c0_9, %c0_10] : memref<8x1xi32, #tpu.memory_space<vmem>>, vector<8x1xi32>
    %c0_11 = arith.constant 0 : index
    %c0_12 = arith.constant 0 : index
    %10 = vector.load %arg4[%c0_11, %c0_12] : memref<64x256xf32, #tpu.memory_space<vmem>>, vector<64x256xf32>
    %cst_13 = arith.constant 0.000000e+00 : f32
    %11 = vector.broadcast %cst_13 : f32 to vector<8x32xf32>
    %c0_i32 = arith.constant 0 : i32
    %c7_i32 = arith.constant 7 : i32
    %12 = arith.subi %c7_i32, %c0_i32 : i32
    %13 = tpu.concatenate %11, %11 in 1 : vector<8x32xf32>, vector<8x32xf32> -> vector<8x64xf32>
    %cst_14 = arith.constant dense<0.000000e+00> : vector<8x256xf32>
    %14 = tpu.matmul %13, %10, %cst_14 {dimension_numbers = #tpu.dot_dimension_numbers<[1], [0], [0], [1], [0, 0, 1, 1], [], []>} : vector<8x64xf32>, vector<64x256xf32>, vector<8x256xf32> -> vector<8x256xf32>
    %15 = vector.extract_strided_slice %14 {offsets = [0, 0], sizes = [8, 128], strides = [1, 1]} : vector<8x256xf32> to vector<8x128xf32>
    %16 = vector.extract_strided_slice %14 {offsets = [0, 128], sizes = [8, 128], strides = [1, 1]} : vector<8x256xf32> to vector<8x128xf32>
    %17 = arith.index_cast %c0_i32 : i32 to index
    %c0_15 = arith.constant 0 : index
    %c0_16 = arith.constant 0 : index
    %18 = vector.load %arg9[%17, %c0_15, %c0_16] : memref<8x8x256xf32, #tpu.memory_space<vmem>>, vector<1x8x128xf32>
    %19 = vector.shape_cast %18 : vector<1x8x128xf32> to vector<8x128xf32>
    %20 = arith.addf %15, %19 : vector<8x128xf32>
    %21 = arith.index_cast %12 : i32 to index
    %c0_17 = arith.constant 0 : index
    %c128 = arith.constant 128 : index
    %22 = vector.load %arg9[%21, %c0_17, %c128] : memref<8x8x256xf32, #tpu.memory_space<vmem>>, vector<1x8x128xf32>
    %23 = vector.shape_cast %22 : vector<1x8x128xf32> to vector<8x128xf32>
    %24 = arith.addf %16, %23 : vector<8x128xf32>
    %25 = arith.negf %20 : vector<8x128xf32>
    %26 = math.exp %25 : vector<8x128xf32>
    %cst_18 = arith.constant 1.000000e+00 : f32
    %27 = vector.broadcast %cst_18 : f32 to vector<8x128xf32>
    %28 = arith.addf %27, %26 : vector<8x128xf32>
    %29 = arith.divf %27, %28 : vector<8x128xf32>
    %30 = math.tanh %20 : vector<8x128xf32>
    %31 = vector.extract_strided_slice %29 {offsets = [0, 0], sizes = [8, 32], strides = [1, 1]} : vector<8x128xf32> to vector<8x32xf32>
    %32 = vector.extract_strided_slice %29 {offsets = [0, 32], sizes = [8, 32], strides = [1, 1]} : vector<8x128xf32> to vector<8x32xf32>
    %33 = vector.extract_strided_slice %29 {offsets = [0, 96], sizes = [8, 32], strides = [1, 1]} : vector<8x128xf32> to vector<8x32xf32>
    %34 = vector.extract_strided_slice %30 {offsets = [0, 64], sizes = [8, 32], strides = [1, 1]} : vector<8x128xf32> to vector<8x32xf32>
    %35 = arith.negf %24 : vector<8x128xf32>
    %36 = math.exp %35 : vector<8x128xf32>
    %cst_19 = arith.constant 1.000000e+00 : f32
    %37 = vector.broadcast %cst_19 : f32 to vector<8x128xf32>
    %38 = arith.addf %37, %36 : vector<8x128xf32>
    %39 = arith.divf %37, %38 : vector<8x128xf32>
    %40 = math.tanh %24 : vector<8x128xf32>
    %41 = vector.extract_strided_slice %39 {offsets = [0, 0], sizes = [8, 32], strides = [1, 1]} : vector<8x128xf32> to vector<8x32xf32>
    %42 = vector.extract_strided_slice %39 {offsets = [0, 32], sizes = [8, 32], strides = [1, 1]} : vector<8x128xf32> to vector<8x32xf32>
    %43 = vector.extract_strided_slice %39 {offsets = [0, 96], sizes = [8, 32], strides = [1, 1]} : vector<8x128xf32> to vector<8x32xf32>
    %44 = vector.extract_strided_slice %40 {offsets = [0, 64], sizes = [8, 32], strides = [1, 1]} : vector<8x128xf32> to vector<8x32xf32>
    %45 = arith.mulf %32, %11 : vector<8x32xf32>
    %46 = arith.mulf %31, %34 : vector<8x32xf32>
    %47 = arith.addf %45, %46 : vector<8x32xf32>
    %48 = math.tanh %47 : vector<8x32xf32>
    %49 = arith.mulf %33, %48 : vector<8x32xf32>
    %50 = arith.mulf %42, %11 : vector<8x32xf32>
    %51 = arith.mulf %41, %44 : vector<8x32xf32>
    %52 = arith.addf %50, %51 : vector<8x32xf32>
    %53 = math.tanh %52 : vector<8x32xf32>
    %54 = arith.mulf %43, %53 : vector<8x32xf32>
    %55 = vector.broadcast %c0_i32 : i32 to vector<8x1xi32>
    %56 = arith.cmpi slt, %55, %9 : vector<8x1xi32>
    %57 = arith.extui %56 : vector<8x1xi1> to vector<8x1xi32>
    %58 = arith.sitofp %57 : vector<8x1xi32> to vector<8x1xf32>
    %59 = vector.broadcast %12 : i32 to vector<8x1xi32>
    %60 = arith.cmpi slt, %59, %9 : vector<8x1xi32>
    %61 = arith.extui %60 : vector<8x1xi1> to vector<8x1xi32>
    %62 = arith.sitofp %61 : vector<8x1xi32> to vector<8x1xf32>
    %63 = vector.broadcast %62 : vector<8x1xf32> to vector<8x32xf32>
    %64 = arith.mulf %63, %54 : vector<8x32xf32>
    %65 = vector.broadcast %62 : vector<8x1xf32> to vector<8x32xf32>
    %66 = arith.mulf %65, %52 : vector<8x32xf32>
    %67 = vector.broadcast %58 : vector<8x1xf32> to vector<8x32xf32>
    %68 = arith.mulf %67, %49 : vector<8x32xf32>
    %69 = arith.addf %11, %68 : vector<8x32xf32>
    %70 = arith.addf %69, %64 : vector<8x32xf32>
    %c1_i32 = arith.constant 1 : i32
    %c7_i32_20 = arith.constant 7 : i32
    %71 = arith.subi %c7_i32_20, %c1_i32 : i32
    %72 = tpu.concatenate %49, %64 in 1 : vector<8x32xf32>, vector<8x32xf32> -> vector<8x64xf32>
    %cst_21 = arith.constant dense<0.000000e+00> : vector<8x256xf32>
    %73 = tpu.matmul %72, %10, %cst_21 {dimension_numbers = #tpu.dot_dimension_numbers<[1], [0], [0], [1], [0, 0, 1, 1], [], []>} : vector<8x64xf32>, vector<64x256xf32>, vector<8x256xf32> -> vector<8x256xf32>
    %74 = vector.extract_strided_slice %73 {offsets = [0, 0], sizes = [8, 128], strides = [1, 1]} : vector<8x256xf32> to vector<8x128xf32>
    %75 = vector.extract_strided_slice %73 {offsets = [0, 128], sizes = [8, 128], strides = [1, 1]} : vector<8x256xf32> to vector<8x128xf32>
    %76 = arith.index_cast %c1_i32 : i32 to index
    %c0_22 = arith.constant 0 : index
    %c0_23 = arith.constant 0 : index
    %77 = vector.load %arg9[%76, %c0_22, %c0_23] : memref<8x8x256xf32, #tpu.memory_space<vmem>>, vector<1x8x128xf32>
    %78 = vector.shape_cast %77 : vector<1x8x128xf32> to vector<8x128xf32>
    %79 = arith.addf %74, %78 : vector<8x128xf32>
    %80 = arith.index_cast %71 : i32 to index
    %c0_24 = arith.constant 0 : index
    %c128_25 = arith.constant 128 : index
    %81 = vector.load %arg9[%80, %c0_24, %c128_25] : memref<8x8x256xf32, #tpu.memory_space<vmem>>, vector<1x8x128xf32>
    %82 = vector.shape_cast %81 : vector<1x8x128xf32> to vector<8x128xf32>
    %83 = arith.addf %75, %82 : vector<8x128xf32>
    %84 = arith.negf %79 : vector<8x128xf32>
    %85 = math.exp %84 : vector<8x128xf32>
    %cst_26 = arith.constant 1.000000e+00 : f32
    %86 = vector.broadcast %cst_26 : f32 to vector<8x128xf32>
    %87 = arith.addf %86, %85 : vector<8x128xf32>
    %88 = arith.divf %86, %87 : vector<8x128xf32>
    %89 = math.tanh %79 : vector<8x128xf32>
    %90 = vector.extract_strided_slice %88 {offsets = [0, 0], sizes = [8, 32], strides = [1, 1]} : vector<8x128xf32> to vector<8x32xf32>
    %91 = vector.extract_strided_slice %88 {offsets = [0, 32], sizes = [8, 32], strides = [1, 1]} : vector<8x128xf32> to vector<8x32xf32>
    %92 = vector.extract_strided_slice %88 {offsets = [0, 96], sizes = [8, 32], strides = [1, 1]} : vector<8x128xf32> to vector<8x32xf32>
    %93 = vector.extract_strided_slice %89 {offsets = [0, 64], sizes = [8, 32], strides = [1, 1]} : vector<8x128xf32> to vector<8x32xf32>
    %94 = arith.negf %83 : vector<8x128xf32>
    %95 = math.exp %94 : vector<8x128xf32>
    %cst_27 = arith.constant 1.000000e+00 : f32
    %96 = vector.broadcast %cst_27 : f32 to vector<8x128xf32>
    %97 = arith.addf %96, %95 : vector<8x128xf32>
    %98 = arith.divf %96, %97 : vector<8x128xf32>
    %99 = math.tanh %83 : vector<8x128xf32>
    %100 = vector.extract_strided_slice %98 {offsets = [0, 0], sizes = [8, 32], strides = [1, 1]} : vector<8x128xf32> to vector<8x32xf32>
    %101 = vector.extract_strided_slice %98 {offsets = [0, 32], sizes = [8, 32], strides = [1, 1]} : vector<8x128xf32> to vector<8x32xf32>
    %102 = vector.extract_strided_slice %98 {offsets = [0, 96], sizes = [8, 32], strides = [1, 1]} : vector<8x128xf32> to vector<8x32xf32>
    %103 = vector.extract_strided_slice %99 {offsets = [0, 64], sizes = [8, 32], strides = [1, 1]} : vector<8x128xf32> to vector<8x32xf32>
    %104 = arith.mulf %91, %47 : vector<8x32xf32>
    %105 = arith.mulf %90, %93 : vector<8x32xf32>
    %106 = arith.addf %104, %105 : vector<8x32xf32>
    %107 = math.tanh %106 : vector<8x32xf32>
    %108 = arith.mulf %92, %107 : vector<8x32xf32>
    %109 = arith.mulf %101, %66 : vector<8x32xf32>
    %110 = arith.mulf %100, %103 : vector<8x32xf32>
    %111 = arith.addf %109, %110 : vector<8x32xf32>
    %112 = math.tanh %111 : vector<8x32xf32>
    %113 = arith.mulf %102, %112 : vector<8x32xf32>
    %114 = vector.broadcast %c1_i32 : i32 to vector<8x1xi32>
    %115 = arith.cmpi slt, %114, %9 : vector<8x1xi32>
    %116 = arith.extui %115 : vector<8x1xi1> to vector<8x1xi32>
    %117 = arith.sitofp %116 : vector<8x1xi32> to vector<8x1xf32>
    %118 = vector.broadcast %71 : i32 to vector<8x1xi32>
    %119 = arith.cmpi slt, %118, %9 : vector<8x1xi32>
    %120 = arith.extui %119 : vector<8x1xi1> to vector<8x1xi32>
    %121 = arith.sitofp %120 : vector<8x1xi32> to vector<8x1xf32>
    %122 = vector.broadcast %121 : vector<8x1xf32> to vector<8x32xf32>
    %123 = arith.mulf %122, %113 : vector<8x32xf32>
    %124 = vector.broadcast %121 : vector<8x1xf32> to vector<8x32xf32>
    %125 = arith.mulf %124, %111 : vector<8x32xf32>
    %126 = vector.broadcast %117 : vector<8x1xf32> to vector<8x32xf32>
    %127 = arith.mulf %126, %108 : vector<8x32xf32>
    %128 = arith.addf %70, %127 : vector<8x32xf32>
    %129 = arith.addf %128, %123 : vector<8x32xf32>
    %c2_i32 = arith.constant 2 : i32
    %c7_i32_28 = arith.constant 7 : i32
    %130 = arith.subi %c7_i32_28, %c2_i32 : i32
    %131 = tpu.concatenate %108, %123 in 1 : vector<8x32xf32>, vector<8x32xf32> -> vector<8x64xf32>
    %cst_29 = arith.constant dense<0.000000e+00> : vector<8x256xf32>
    %132 = tpu.matmul %131, %10, %cst_29 {dimension_numbers = #tpu.dot_dimension_numbers<[1], [0], [0], [1], [0, 0, 1, 1], [], []>} : vector<8x64xf32>, vector<64x256xf32>, vector<8x256xf32> -> vector<8x256xf32>
    %133 = vector.extract_strided_slice %132 {offsets = [0, 0], sizes = [8, 128], strides = [1, 1]} : vector<8x256xf32> to vector<8x128xf32>
    %134 = vector.extract_strided_slice %132 {offsets = [0, 128], sizes = [8, 128], strides = [1, 1]} : vector<8x256xf32> to vector<8x128xf32>
    %135 = arith.index_cast %c2_i32 : i32 to index
    %c0_30 = arith.constant 0 : index
    %c0_31 = arith.constant 0 : index
    %136 = vector.load %arg9[%135, %c0_30, %c0_31] : memref<8x8x256xf32, #tpu.memory_space<vmem>>, vector<1x8x128xf32>
    %137 = vector.shape_cast %136 : vector<1x8x128xf32> to vector<8x128xf32>
    %138 = arith.addf %133, %137 : vector<8x128xf32>
    %139 = arith.index_cast %130 : i32 to index
    %c0_32 = arith.constant 0 : index
    %c128_33 = arith.constant 128 : index
    %140 = vector.load %arg9[%139, %c0_32, %c128_33] : memref<8x8x256xf32, #tpu.memory_space<vmem>>, vector<1x8x128xf32>
    %141 = vector.shape_cast %140 : vector<1x8x128xf32> to vector<8x128xf32>
    %142 = arith.addf %134, %141 : vector<8x128xf32>
    %143 = arith.negf %138 : vector<8x128xf32>
    %144 = math.exp %143 : vector<8x128xf32>
    %cst_34 = arith.constant 1.000000e+00 : f32
    %145 = vector.broadcast %cst_34 : f32 to vector<8x128xf32>
    %146 = arith.addf %145, %144 : vector<8x128xf32>
    %147 = arith.divf %145, %146 : vector<8x128xf32>
    %148 = math.tanh %138 : vector<8x128xf32>
    %149 = vector.extract_strided_slice %147 {offsets = [0, 0], sizes = [8, 32], strides = [1, 1]} : vector<8x128xf32> to vector<8x32xf32>
    %150 = vector.extract_strided_slice %147 {offsets = [0, 32], sizes = [8, 32], strides = [1, 1]} : vector<8x128xf32> to vector<8x32xf32>
    %151 = vector.extract_strided_slice %147 {offsets = [0, 96], sizes = [8, 32], strides = [1, 1]} : vector<8x128xf32> to vector<8x32xf32>
    %152 = vector.extract_strided_slice %148 {offsets = [0, 64], sizes = [8, 32], strides = [1, 1]} : vector<8x128xf32> to vector<8x32xf32>
    %153 = arith.negf %142 : vector<8x128xf32>
    %154 = math.exp %153 : vector<8x128xf32>
    %cst_35 = arith.constant 1.000000e+00 : f32
    %155 = vector.broadcast %cst_35 : f32 to vector<8x128xf32>
    %156 = arith.addf %155, %154 : vector<8x128xf32>
    %157 = arith.divf %155, %156 : vector<8x128xf32>
    %158 = math.tanh %142 : vector<8x128xf32>
    %159 = vector.extract_strided_slice %157 {offsets = [0, 0], sizes = [8, 32], strides = [1, 1]} : vector<8x128xf32> to vector<8x32xf32>
    %160 = vector.extract_strided_slice %157 {offsets = [0, 32], sizes = [8, 32], strides = [1, 1]} : vector<8x128xf32> to vector<8x32xf32>
    %161 = vector.extract_strided_slice %157 {offsets = [0, 96], sizes = [8, 32], strides = [1, 1]} : vector<8x128xf32> to vector<8x32xf32>
    %162 = vector.extract_strided_slice %158 {offsets = [0, 64], sizes = [8, 32], strides = [1, 1]} : vector<8x128xf32> to vector<8x32xf32>
    %163 = arith.mulf %150, %106 : vector<8x32xf32>
    %164 = arith.mulf %149, %152 : vector<8x32xf32>
    %165 = arith.addf %163, %164 : vector<8x32xf32>
    %166 = math.tanh %165 : vector<8x32xf32>
    %167 = arith.mulf %151, %166 : vector<8x32xf32>
    %168 = arith.mulf %160, %125 : vector<8x32xf32>
    %169 = arith.mulf %159, %162 : vector<8x32xf32>
    %170 = arith.addf %168, %169 : vector<8x32xf32>
    %171 = math.tanh %170 : vector<8x32xf32>
    %172 = arith.mulf %161, %171 : vector<8x32xf32>
    %173 = vector.broadcast %c2_i32 : i32 to vector<8x1xi32>
    %174 = arith.cmpi slt, %173, %9 : vector<8x1xi32>
    %175 = arith.extui %174 : vector<8x1xi1> to vector<8x1xi32>
    %176 = arith.sitofp %175 : vector<8x1xi32> to vector<8x1xf32>
    %177 = vector.broadcast %130 : i32 to vector<8x1xi32>
    %178 = arith.cmpi slt, %177, %9 : vector<8x1xi32>
    %179 = arith.extui %178 : vector<8x1xi1> to vector<8x1xi32>
    %180 = arith.sitofp %179 : vector<8x1xi32> to vector<8x1xf32>
    %181 = vector.broadcast %180 : vector<8x1xf32> to vector<8x32xf32>
    %182 = arith.mulf %181, %172 : vector<8x32xf32>
    %183 = vector.broadcast %180 : vector<8x1xf32> to vector<8x32xf32>
    %184 = arith.mulf %183, %170 : vector<8x32xf32>
    %185 = vector.broadcast %176 : vector<8x1xf32> to vector<8x32xf32>
    %186 = arith.mulf %185, %167 : vector<8x32xf32>
    %187 = arith.addf %129, %186 : vector<8x32xf32>
    %188 = arith.addf %187, %182 : vector<8x32xf32>
    %c3_i32 = arith.constant 3 : i32
    %c7_i32_36 = arith.constant 7 : i32
    %189 = arith.subi %c7_i32_36, %c3_i32 : i32
    %190 = tpu.concatenate %167, %182 in 1 : vector<8x32xf32>, vector<8x32xf32> -> vector<8x64xf32>
    %cst_37 = arith.constant dense<0.000000e+00> : vector<8x256xf32>
    %191 = tpu.matmul %190, %10, %cst_37 {dimension_numbers = #tpu.dot_dimension_numbers<[1], [0], [0], [1], [0, 0, 1, 1], [], []>} : vector<8x64xf32>, vector<64x256xf32>, vector<8x256xf32> -> vector<8x256xf32>
    %192 = vector.extract_strided_slice %191 {offsets = [0, 0], sizes = [8, 128], strides = [1, 1]} : vector<8x256xf32> to vector<8x128xf32>
    %193 = vector.extract_strided_slice %191 {offsets = [0, 128], sizes = [8, 128], strides = [1, 1]} : vector<8x256xf32> to vector<8x128xf32>
    %194 = arith.index_cast %c3_i32 : i32 to index
    %c0_38 = arith.constant 0 : index
    %c0_39 = arith.constant 0 : index
    %195 = vector.load %arg9[%194, %c0_38, %c0_39] : memref<8x8x256xf32, #tpu.memory_space<vmem>>, vector<1x8x128xf32>
    %196 = vector.shape_cast %195 : vector<1x8x128xf32> to vector<8x128xf32>
    %197 = arith.addf %192, %196 : vector<8x128xf32>
    %198 = arith.index_cast %189 : i32 to index
    %c0_40 = arith.constant 0 : index
    %c128_41 = arith.constant 128 : index
    %199 = vector.load %arg9[%198, %c0_40, %c128_41] : memref<8x8x256xf32, #tpu.memory_space<vmem>>, vector<1x8x128xf32>
    %200 = vector.shape_cast %199 : vector<1x8x128xf32> to vector<8x128xf32>
    %201 = arith.addf %193, %200 : vector<8x128xf32>
    %202 = arith.negf %197 : vector<8x128xf32>
    %203 = math.exp %202 : vector<8x128xf32>
    %cst_42 = arith.constant 1.000000e+00 : f32
    %204 = vector.broadcast %cst_42 : f32 to vector<8x128xf32>
    %205 = arith.addf %204, %203 : vector<8x128xf32>
    %206 = arith.divf %204, %205 : vector<8x128xf32>
    %207 = math.tanh %197 : vector<8x128xf32>
    %208 = vector.extract_strided_slice %206 {offsets = [0, 0], sizes = [8, 32], strides = [1, 1]} : vector<8x128xf32> to vector<8x32xf32>
    %209 = vector.extract_strided_slice %206 {offsets = [0, 32], sizes = [8, 32], strides = [1, 1]} : vector<8x128xf32> to vector<8x32xf32>
    %210 = vector.extract_strided_slice %206 {offsets = [0, 96], sizes = [8, 32], strides = [1, 1]} : vector<8x128xf32> to vector<8x32xf32>
    %211 = vector.extract_strided_slice %207 {offsets = [0, 64], sizes = [8, 32], strides = [1, 1]} : vector<8x128xf32> to vector<8x32xf32>
    %212 = arith.negf %201 : vector<8x128xf32>
    %213 = math.exp %212 : vector<8x128xf32>
    %cst_43 = arith.constant 1.000000e+00 : f32
    %214 = vector.broadcast %cst_43 : f32 to vector<8x128xf32>
    %215 = arith.addf %214, %213 : vector<8x128xf32>
    %216 = arith.divf %214, %215 : vector<8x128xf32>
    %217 = math.tanh %201 : vector<8x128xf32>
    %218 = vector.extract_strided_slice %216 {offsets = [0, 0], sizes = [8, 32], strides = [1, 1]} : vector<8x128xf32> to vector<8x32xf32>
    %219 = vector.extract_strided_slice %216 {offsets = [0, 32], sizes = [8, 32], strides = [1, 1]} : vector<8x128xf32> to vector<8x32xf32>
    %220 = vector.extract_strided_slice %216 {offsets = [0, 96], sizes = [8, 32], strides = [1, 1]} : vector<8x128xf32> to vector<8x32xf32>
    %221 = vector.extract_strided_slice %217 {offsets = [0, 64], sizes = [8, 32], strides = [1, 1]} : vector<8x128xf32> to vector<8x32xf32>
    %222 = arith.mulf %209, %165 : vector<8x32xf32>
    %223 = arith.mulf %208, %211 : vector<8x32xf32>
    %224 = arith.addf %222, %223 : vector<8x32xf32>
    %225 = math.tanh %224 : vector<8x32xf32>
    %226 = arith.mulf %210, %225 : vector<8x32xf32>
    %227 = arith.mulf %219, %184 : vector<8x32xf32>
    %228 = arith.mulf %218, %221 : vector<8x32xf32>
    %229 = arith.addf %227, %228 : vector<8x32xf32>
    %230 = math.tanh %229 : vector<8x32xf32>
    %231 = arith.mulf %220, %230 : vector<8x32xf32>
    %232 = vector.broadcast %c3_i32 : i32 to vector<8x1xi32>
    %233 = arith.cmpi slt, %232, %9 : vector<8x1xi32>
    %234 = arith.extui %233 : vector<8x1xi1> to vector<8x1xi32>
    %235 = arith.sitofp %234 : vector<8x1xi32> to vector<8x1xf32>
    %236 = vector.broadcast %189 : i32 to vector<8x1xi32>
    %237 = arith.cmpi slt, %236, %9 : vector<8x1xi32>
    %238 = arith.extui %237 : vector<8x1xi1> to vector<8x1xi32>
    %239 = arith.sitofp %238 : vector<8x1xi32> to vector<8x1xf32>
    %240 = vector.broadcast %239 : vector<8x1xf32> to vector<8x32xf32>
    %241 = arith.mulf %240, %231 : vector<8x32xf32>
    %242 = vector.broadcast %239 : vector<8x1xf32> to vector<8x32xf32>
    %243 = arith.mulf %242, %229 : vector<8x32xf32>
    %244 = vector.broadcast %235 : vector<8x1xf32> to vector<8x32xf32>
    %245 = arith.mulf %244, %226 : vector<8x32xf32>
    %246 = arith.addf %188, %245 : vector<8x32xf32>
    %247 = arith.addf %246, %241 : vector<8x32xf32>
    %c4_i32 = arith.constant 4 : i32
    %c7_i32_44 = arith.constant 7 : i32
    %248 = arith.subi %c7_i32_44, %c4_i32 : i32
    %249 = tpu.concatenate %226, %241 in 1 : vector<8x32xf32>, vector<8x32xf32> -> vector<8x64xf32>
    %cst_45 = arith.constant dense<0.000000e+00> : vector<8x256xf32>
    %250 = tpu.matmul %249, %10, %cst_45 {dimension_numbers = #tpu.dot_dimension_numbers<[1], [0], [0], [1], [0, 0, 1, 1], [], []>} : vector<8x64xf32>, vector<64x256xf32>, vector<8x256xf32> -> vector<8x256xf32>
    %251 = vector.extract_strided_slice %250 {offsets = [0, 0], sizes = [8, 128], strides = [1, 1]} : vector<8x256xf32> to vector<8x128xf32>
    %252 = vector.extract_strided_slice %250 {offsets = [0, 128], sizes = [8, 128], strides = [1, 1]} : vector<8x256xf32> to vector<8x128xf32>
    %253 = arith.index_cast %c4_i32 : i32 to index
    %c0_46 = arith.constant 0 : index
    %c0_47 = arith.constant 0 : index
    %254 = vector.load %arg9[%253, %c0_46, %c0_47] : memref<8x8x256xf32, #tpu.memory_space<vmem>>, vector<1x8x128xf32>
    %255 = vector.shape_cast %254 : vector<1x8x128xf32> to vector<8x128xf32>
    %256 = arith.addf %251, %255 : vector<8x128xf32>
    %257 = arith.index_cast %248 : i32 to index
    %c0_48 = arith.constant 0 : index
    %c128_49 = arith.constant 128 : index
    %258 = vector.load %arg9[%257, %c0_48, %c128_49] : memref<8x8x256xf32, #tpu.memory_space<vmem>>, vector<1x8x128xf32>
    %259 = vector.shape_cast %258 : vector<1x8x128xf32> to vector<8x128xf32>
    %260 = arith.addf %252, %259 : vector<8x128xf32>
    %261 = arith.negf %256 : vector<8x128xf32>
    %262 = math.exp %261 : vector<8x128xf32>
    %cst_50 = arith.constant 1.000000e+00 : f32
    %263 = vector.broadcast %cst_50 : f32 to vector<8x128xf32>
    %264 = arith.addf %263, %262 : vector<8x128xf32>
    %265 = arith.divf %263, %264 : vector<8x128xf32>
    %266 = math.tanh %256 : vector<8x128xf32>
    %267 = vector.extract_strided_slice %265 {offsets = [0, 0], sizes = [8, 32], strides = [1, 1]} : vector<8x128xf32> to vector<8x32xf32>
    %268 = vector.extract_strided_slice %265 {offsets = [0, 32], sizes = [8, 32], strides = [1, 1]} : vector<8x128xf32> to vector<8x32xf32>
    %269 = vector.extract_strided_slice %265 {offsets = [0, 96], sizes = [8, 32], strides = [1, 1]} : vector<8x128xf32> to vector<8x32xf32>
    %270 = vector.extract_strided_slice %266 {offsets = [0, 64], sizes = [8, 32], strides = [1, 1]} : vector<8x128xf32> to vector<8x32xf32>
    %271 = arith.negf %260 : vector<8x128xf32>
    %272 = math.exp %271 : vector<8x128xf32>
    %cst_51 = arith.constant 1.000000e+00 : f32
    %273 = vector.broadcast %cst_51 : f32 to vector<8x128xf32>
    %274 = arith.addf %273, %272 : vector<8x128xf32>
    %275 = arith.divf %273, %274 : vector<8x128xf32>
    %276 = math.tanh %260 : vector<8x128xf32>
    %277 = vector.extract_strided_slice %275 {offsets = [0, 0], sizes = [8, 32], strides = [1, 1]} : vector<8x128xf32> to vector<8x32xf32>
    %278 = vector.extract_strided_slice %275 {offsets = [0, 32], sizes = [8, 32], strides = [1, 1]} : vector<8x128xf32> to vector<8x32xf32>
    %279 = vector.extract_strided_slice %275 {offsets = [0, 96], sizes = [8, 32], strides = [1, 1]} : vector<8x128xf32> to vector<8x32xf32>
    %280 = vector.extract_strided_slice %276 {offsets = [0, 64], sizes = [8, 32], strides = [1, 1]} : vector<8x128xf32> to vector<8x32xf32>
    %281 = arith.mulf %268, %224 : vector<8x32xf32>
    %282 = arith.mulf %267, %270 : vector<8x32xf32>
    %283 = arith.addf %281, %282 : vector<8x32xf32>
    %284 = math.tanh %283 : vector<8x32xf32>
    %285 = arith.mulf %269, %284 : vector<8x32xf32>
    %286 = arith.mulf %278, %243 : vector<8x32xf32>
    %287 = arith.mulf %277, %280 : vector<8x32xf32>
    %288 = arith.addf %286, %287 : vector<8x32xf32>
    %289 = math.tanh %288 : vector<8x32xf32>
    %290 = arith.mulf %279, %289 : vector<8x32xf32>
    %291 = vector.broadcast %c4_i32 : i32 to vector<8x1xi32>
    %292 = arith.cmpi slt, %291, %9 : vector<8x1xi32>
    %293 = arith.extui %292 : vector<8x1xi1> to vector<8x1xi32>
    %294 = arith.sitofp %293 : vector<8x1xi32> to vector<8x1xf32>
    %295 = vector.broadcast %248 : i32 to vector<8x1xi32>
    %296 = arith.cmpi slt, %295, %9 : vector<8x1xi32>
    %297 = arith.extui %296 : vector<8x1xi1> to vector<8x1xi32>
    %298 = arith.sitofp %297 : vector<8x1xi32> to vector<8x1xf32>
    %299 = vector.broadcast %298 : vector<8x1xf32> to vector<8x32xf32>
    %300 = arith.mulf %299, %290 : vector<8x32xf32>
    %301 = vector.broadcast %298 : vector<8x1xf32> to vector<8x32xf32>
    %302 = arith.mulf %301, %288 : vector<8x32xf32>
    %303 = vector.broadcast %294 : vector<8x1xf32> to vector<8x32xf32>
    %304 = arith.mulf %303, %285 : vector<8x32xf32>
    %305 = arith.addf %247, %304 : vector<8x32xf32>
    %306 = arith.addf %305, %300 : vector<8x32xf32>
    %c5_i32 = arith.constant 5 : i32
    %c7_i32_52 = arith.constant 7 : i32
    %307 = arith.subi %c7_i32_52, %c5_i32 : i32
    %308 = tpu.concatenate %285, %300 in 1 : vector<8x32xf32>, vector<8x32xf32> -> vector<8x64xf32>
    %cst_53 = arith.constant dense<0.000000e+00> : vector<8x256xf32>
    %309 = tpu.matmul %308, %10, %cst_53 {dimension_numbers = #tpu.dot_dimension_numbers<[1], [0], [0], [1], [0, 0, 1, 1], [], []>} : vector<8x64xf32>, vector<64x256xf32>, vector<8x256xf32> -> vector<8x256xf32>
    %310 = vector.extract_strided_slice %309 {offsets = [0, 0], sizes = [8, 128], strides = [1, 1]} : vector<8x256xf32> to vector<8x128xf32>
    %311 = vector.extract_strided_slice %309 {offsets = [0, 128], sizes = [8, 128], strides = [1, 1]} : vector<8x256xf32> to vector<8x128xf32>
    %312 = arith.index_cast %c5_i32 : i32 to index
    %c0_54 = arith.constant 0 : index
    %c0_55 = arith.constant 0 : index
    %313 = vector.load %arg9[%312, %c0_54, %c0_55] : memref<8x8x256xf32, #tpu.memory_space<vmem>>, vector<1x8x128xf32>
    %314 = vector.shape_cast %313 : vector<1x8x128xf32> to vector<8x128xf32>
    %315 = arith.addf %310, %314 : vector<8x128xf32>
    %316 = arith.index_cast %307 : i32 to index
    %c0_56 = arith.constant 0 : index
    %c128_57 = arith.constant 128 : index
    %317 = vector.load %arg9[%316, %c0_56, %c128_57] : memref<8x8x256xf32, #tpu.memory_space<vmem>>, vector<1x8x128xf32>
    %318 = vector.shape_cast %317 : vector<1x8x128xf32> to vector<8x128xf32>
    %319 = arith.addf %311, %318 : vector<8x128xf32>
    %320 = arith.negf %315 : vector<8x128xf32>
    %321 = math.exp %320 : vector<8x128xf32>
    %cst_58 = arith.constant 1.000000e+00 : f32
    %322 = vector.broadcast %cst_58 : f32 to vector<8x128xf32>
    %323 = arith.addf %322, %321 : vector<8x128xf32>
    %324 = arith.divf %322, %323 : vector<8x128xf32>
    %325 = math.tanh %315 : vector<8x128xf32>
    %326 = vector.extract_strided_slice %324 {offsets = [0, 0], sizes = [8, 32], strides = [1, 1]} : vector<8x128xf32> to vector<8x32xf32>
    %327 = vector.extract_strided_slice %324 {offsets = [0, 32], sizes = [8, 32], strides = [1, 1]} : vector<8x128xf32> to vector<8x32xf32>
    %328 = vector.extract_strided_slice %324 {offsets = [0, 96], sizes = [8, 32], strides = [1, 1]} : vector<8x128xf32> to vector<8x32xf32>
    %329 = vector.extract_strided_slice %325 {offsets = [0, 64], sizes = [8, 32], strides = [1, 1]} : vector<8x128xf32> to vector<8x32xf32>
    %330 = arith.negf %319 : vector<8x128xf32>
    %331 = math.exp %330 : vector<8x128xf32>
    %cst_59 = arith.constant 1.000000e+00 : f32
    %332 = vector.broadcast %cst_59 : f32 to vector<8x128xf32>
    %333 = arith.addf %332, %331 : vector<8x128xf32>
    %334 = arith.divf %332, %333 : vector<8x128xf32>
    %335 = math.tanh %319 : vector<8x128xf32>
    %336 = vector.extract_strided_slice %334 {offsets = [0, 0], sizes = [8, 32], strides = [1, 1]} : vector<8x128xf32> to vector<8x32xf32>
    %337 = vector.extract_strided_slice %334 {offsets = [0, 32], sizes = [8, 32], strides = [1, 1]} : vector<8x128xf32> to vector<8x32xf32>
    %338 = vector.extract_strided_slice %334 {offsets = [0, 96], sizes = [8, 32], strides = [1, 1]} : vector<8x128xf32> to vector<8x32xf32>
    %339 = vector.extract_strided_slice %335 {offsets = [0, 64], sizes = [8, 32], strides = [1, 1]} : vector<8x128xf32> to vector<8x32xf32>
    %340 = arith.mulf %327, %283 : vector<8x32xf32>
    %341 = arith.mulf %326, %329 : vector<8x32xf32>
    %342 = arith.addf %340, %341 : vector<8x32xf32>
    %343 = math.tanh %342 : vector<8x32xf32>
    %344 = arith.mulf %328, %343 : vector<8x32xf32>
    %345 = arith.mulf %337, %302 : vector<8x32xf32>
    %346 = arith.mulf %336, %339 : vector<8x32xf32>
    %347 = arith.addf %345, %346 : vector<8x32xf32>
    %348 = math.tanh %347 : vector<8x32xf32>
    %349 = arith.mulf %338, %348 : vector<8x32xf32>
    %350 = vector.broadcast %c5_i32 : i32 to vector<8x1xi32>
    %351 = arith.cmpi slt, %350, %9 : vector<8x1xi32>
    %352 = arith.extui %351 : vector<8x1xi1> to vector<8x1xi32>
    %353 = arith.sitofp %352 : vector<8x1xi32> to vector<8x1xf32>
    %354 = vector.broadcast %307 : i32 to vector<8x1xi32>
    %355 = arith.cmpi slt, %354, %9 : vector<8x1xi32>
    %356 = arith.extui %355 : vector<8x1xi1> to vector<8x1xi32>
    %357 = arith.sitofp %356 : vector<8x1xi32> to vector<8x1xf32>
    %358 = vector.broadcast %357 : vector<8x1xf32> to vector<8x32xf32>
    %359 = arith.mulf %358, %349 : vector<8x32xf32>
    %360 = vector.broadcast %357 : vector<8x1xf32> to vector<8x32xf32>
    %361 = arith.mulf %360, %347 : vector<8x32xf32>
    %362 = vector.broadcast %353 : vector<8x1xf32> to vector<8x32xf32>
    %363 = arith.mulf %362, %344 : vector<8x32xf32>
    %364 = arith.addf %306, %363 : vector<8x32xf32>
    %365 = arith.addf %364, %359 : vector<8x32xf32>
    %c6_i32 = arith.constant 6 : i32
    %c7_i32_60 = arith.constant 7 : i32
    %366 = arith.subi %c7_i32_60, %c6_i32 : i32
    %367 = tpu.concatenate %344, %359 in 1 : vector<8x32xf32>, vector<8x32xf32> -> vector<8x64xf32>
    %cst_61 = arith.constant dense<0.000000e+00> : vector<8x256xf32>
    %368 = tpu.matmul %367, %10, %cst_61 {dimension_numbers = #tpu.dot_dimension_numbers<[1], [0], [0], [1], [0, 0, 1, 1], [], []>} : vector<8x64xf32>, vector<64x256xf32>, vector<8x256xf32> -> vector<8x256xf32>
    %369 = vector.extract_strided_slice %368 {offsets = [0, 0], sizes = [8, 128], strides = [1, 1]} : vector<8x256xf32> to vector<8x128xf32>
    %370 = vector.extract_strided_slice %368 {offsets = [0, 128], sizes = [8, 128], strides = [1, 1]} : vector<8x256xf32> to vector<8x128xf32>
    %371 = arith.index_cast %c6_i32 : i32 to index
    %c0_62 = arith.constant 0 : index
    %c0_63 = arith.constant 0 : index
    %372 = vector.load %arg9[%371, %c0_62, %c0_63] : memref<8x8x256xf32, #tpu.memory_space<vmem>>, vector<1x8x128xf32>
    %373 = vector.shape_cast %372 : vector<1x8x128xf32> to vector<8x128xf32>
    %374 = arith.addf %369, %373 : vector<8x128xf32>
    %375 = arith.index_cast %366 : i32 to index
    %c0_64 = arith.constant 0 : index
    %c128_65 = arith.constant 128 : index
    %376 = vector.load %arg9[%375, %c0_64, %c128_65] : memref<8x8x256xf32, #tpu.memory_space<vmem>>, vector<1x8x128xf32>
    %377 = vector.shape_cast %376 : vector<1x8x128xf32> to vector<8x128xf32>
    %378 = arith.addf %370, %377 : vector<8x128xf32>
    %379 = arith.negf %374 : vector<8x128xf32>
    %380 = math.exp %379 : vector<8x128xf32>
    %cst_66 = arith.constant 1.000000e+00 : f32
    %381 = vector.broadcast %cst_66 : f32 to vector<8x128xf32>
    %382 = arith.addf %381, %380 : vector<8x128xf32>
    %383 = arith.divf %381, %382 : vector<8x128xf32>
    %384 = math.tanh %374 : vector<8x128xf32>
    %385 = vector.extract_strided_slice %383 {offsets = [0, 0], sizes = [8, 32], strides = [1, 1]} : vector<8x128xf32> to vector<8x32xf32>
    %386 = vector.extract_strided_slice %383 {offsets = [0, 32], sizes = [8, 32], strides = [1, 1]} : vector<8x128xf32> to vector<8x32xf32>
    %387 = vector.extract_strided_slice %383 {offsets = [0, 96], sizes = [8, 32], strides = [1, 1]} : vector<8x128xf32> to vector<8x32xf32>
    %388 = vector.extract_strided_slice %384 {offsets = [0, 64], sizes = [8, 32], strides = [1, 1]} : vector<8x128xf32> to vector<8x32xf32>
    %389 = arith.negf %378 : vector<8x128xf32>
    %390 = math.exp %389 : vector<8x128xf32>
    %cst_67 = arith.constant 1.000000e+00 : f32
    %391 = vector.broadcast %cst_67 : f32 to vector<8x128xf32>
    %392 = arith.addf %391, %390 : vector<8x128xf32>
    %393 = arith.divf %391, %392 : vector<8x128xf32>
    %394 = math.tanh %378 : vector<8x128xf32>
    %395 = vector.extract_strided_slice %393 {offsets = [0, 0], sizes = [8, 32], strides = [1, 1]} : vector<8x128xf32> to vector<8x32xf32>
    %396 = vector.extract_strided_slice %393 {offsets = [0, 32], sizes = [8, 32], strides = [1, 1]} : vector<8x128xf32> to vector<8x32xf32>
    %397 = vector.extract_strided_slice %393 {offsets = [0, 96], sizes = [8, 32], strides = [1, 1]} : vector<8x128xf32> to vector<8x32xf32>
    %398 = vector.extract_strided_slice %394 {offsets = [0, 64], sizes = [8, 32], strides = [1, 1]} : vector<8x128xf32> to vector<8x32xf32>
    %399 = arith.mulf %386, %342 : vector<8x32xf32>
    %400 = arith.mulf %385, %388 : vector<8x32xf32>
    %401 = arith.addf %399, %400 : vector<8x32xf32>
    %402 = math.tanh %401 : vector<8x32xf32>
    %403 = arith.mulf %387, %402 : vector<8x32xf32>
    %404 = arith.mulf %396, %361 : vector<8x32xf32>
    %405 = arith.mulf %395, %398 : vector<8x32xf32>
    %406 = arith.addf %404, %405 : vector<8x32xf32>
    %407 = math.tanh %406 : vector<8x32xf32>
    %408 = arith.mulf %397, %407 : vector<8x32xf32>
    %409 = vector.broadcast %c6_i32 : i32 to vector<8x1xi32>
    %410 = arith.cmpi slt, %409, %9 : vector<8x1xi32>
    %411 = arith.extui %410 : vector<8x1xi1> to vector<8x1xi32>
    %412 = arith.sitofp %411 : vector<8x1xi32> to vector<8x1xf32>
    %413 = vector.broadcast %366 : i32 to vector<8x1xi32>
    %414 = arith.cmpi slt, %413, %9 : vector<8x1xi32>
    %415 = arith.extui %414 : vector<8x1xi1> to vector<8x1xi32>
    %416 = arith.sitofp %415 : vector<8x1xi32> to vector<8x1xf32>
    %417 = vector.broadcast %416 : vector<8x1xf32> to vector<8x32xf32>
    %418 = arith.mulf %417, %408 : vector<8x32xf32>
    %419 = vector.broadcast %416 : vector<8x1xf32> to vector<8x32xf32>
    %420 = arith.mulf %419, %406 : vector<8x32xf32>
    %421 = vector.broadcast %412 : vector<8x1xf32> to vector<8x32xf32>
    %422 = arith.mulf %421, %403 : vector<8x32xf32>
    %423 = arith.addf %365, %422 : vector<8x32xf32>
    %424 = arith.addf %423, %418 : vector<8x32xf32>
    %c7_i32_68 = arith.constant 7 : i32
    %c7_i32_69 = arith.constant 7 : i32
    %425 = arith.subi %c7_i32_69, %c7_i32_68 : i32
    %426 = tpu.concatenate %403, %418 in 1 : vector<8x32xf32>, vector<8x32xf32> -> vector<8x64xf32>
    %cst_70 = arith.constant dense<0.000000e+00> : vector<8x256xf32>
    %427 = tpu.matmul %426, %10, %cst_70 {dimension_numbers = #tpu.dot_dimension_numbers<[1], [0], [0], [1], [0, 0, 1, 1], [], []>} : vector<8x64xf32>, vector<64x256xf32>, vector<8x256xf32> -> vector<8x256xf32>
    %428 = vector.extract_strided_slice %427 {offsets = [0, 0], sizes = [8, 128], strides = [1, 1]} : vector<8x256xf32> to vector<8x128xf32>
    %429 = vector.extract_strided_slice %427 {offsets = [0, 128], sizes = [8, 128], strides = [1, 1]} : vector<8x256xf32> to vector<8x128xf32>
    %430 = arith.index_cast %c7_i32_68 : i32 to index
    %c0_71 = arith.constant 0 : index
    %c0_72 = arith.constant 0 : index
    %431 = vector.load %arg9[%430, %c0_71, %c0_72] : memref<8x8x256xf32, #tpu.memory_space<vmem>>, vector<1x8x128xf32>
    %432 = vector.shape_cast %431 : vector<1x8x128xf32> to vector<8x128xf32>
    %433 = arith.addf %428, %432 : vector<8x128xf32>
    %434 = arith.index_cast %425 : i32 to index
    %c0_73 = arith.constant 0 : index
    %c128_74 = arith.constant 128 : index
    %435 = vector.load %arg9[%434, %c0_73, %c128_74] : memref<8x8x256xf32, #tpu.memory_space<vmem>>, vector<1x8x128xf32>
    %436 = vector.shape_cast %435 : vector<1x8x128xf32> to vector<8x128xf32>
    %437 = arith.addf %429, %436 : vector<8x128xf32>
    %438 = arith.negf %433 : vector<8x128xf32>
    %439 = math.exp %438 : vector<8x128xf32>
    %cst_75 = arith.constant 1.000000e+00 : f32
    %440 = vector.broadcast %cst_75 : f32 to vector<8x128xf32>
    %441 = arith.addf %440, %439 : vector<8x128xf32>
    %442 = arith.divf %440, %441 : vector<8x128xf32>
    %443 = math.tanh %433 : vector<8x128xf32>
    %444 = vector.extract_strided_slice %442 {offsets = [0, 0], sizes = [8, 32], strides = [1, 1]} : vector<8x128xf32> to vector<8x32xf32>
    %445 = vector.extract_strided_slice %442 {offsets = [0, 32], sizes = [8, 32], strides = [1, 1]} : vector<8x128xf32> to vector<8x32xf32>
    %446 = vector.extract_strided_slice %442 {offsets = [0, 96], sizes = [8, 32], strides = [1, 1]} : vector<8x128xf32> to vector<8x32xf32>
    %447 = vector.extract_strided_slice %443 {offsets = [0, 64], sizes = [8, 32], strides = [1, 1]} : vector<8x128xf32> to vector<8x32xf32>
    %448 = arith.negf %437 : vector<8x128xf32>
    %449 = math.exp %448 : vector<8x128xf32>
    %cst_76 = arith.constant 1.000000e+00 : f32
    %450 = vector.broadcast %cst_76 : f32 to vector<8x128xf32>
    %451 = arith.addf %450, %449 : vector<8x128xf32>
    %452 = arith.divf %450, %451 : vector<8x128xf32>
    %453 = math.tanh %437 : vector<8x128xf32>
    %454 = vector.extract_strided_slice %452 {offsets = [0, 0], sizes = [8, 32], strides = [1, 1]} : vector<8x128xf32> to vector<8x32xf32>
    %455 = vector.extract_strided_slice %452 {offsets = [0, 32], sizes = [8, 32], strides = [1, 1]} : vector<8x128xf32> to vector<8x32xf32>
    %456 = vector.extract_strided_slice %452 {offsets = [0, 96], sizes = [8, 32], strides = [1, 1]} : vector<8x128xf32> to vector<8x32xf32>
    %457 = vector.extract_strided_slice %453 {offsets = [0, 64], sizes = [8, 32], strides = [1, 1]} : vector<8x128xf32> to vector<8x32xf32>
    %458 = arith.mulf %445, %401 : vector<8x32xf32>
    %459 = arith.mulf %444, %447 : vector<8x32xf32>
    %460 = arith.addf %458, %459 : vector<8x32xf32>
    %461 = math.tanh %460 : vector<8x32xf32>
    %462 = arith.mulf %446, %461 : vector<8x32xf32>
    %463 = arith.mulf %455, %420 : vector<8x32xf32>
    %464 = arith.mulf %454, %457 : vector<8x32xf32>
    %465 = arith.addf %463, %464 : vector<8x32xf32>
    %466 = math.tanh %465 : vector<8x32xf32>
    %467 = arith.mulf %456, %466 : vector<8x32xf32>
    %468 = vector.broadcast %c7_i32_68 : i32 to vector<8x1xi32>
    %469 = arith.cmpi slt, %468, %9 : vector<8x1xi32>
    %470 = arith.extui %469 : vector<8x1xi1> to vector<8x1xi32>
    %471 = arith.sitofp %470 : vector<8x1xi32> to vector<8x1xf32>
    %472 = vector.broadcast %425 : i32 to vector<8x1xi32>
    %473 = arith.cmpi slt, %472, %9 : vector<8x1xi32>
    %474 = arith.extui %473 : vector<8x1xi1> to vector<8x1xi32>
    %475 = arith.sitofp %474 : vector<8x1xi32> to vector<8x1xf32>
    %476 = vector.broadcast %475 : vector<8x1xf32> to vector<8x32xf32>
    %477 = arith.mulf %476, %467 : vector<8x32xf32>
    %478 = vector.broadcast %475 : vector<8x1xf32> to vector<8x32xf32>
    %479 = arith.mulf %478, %465 : vector<8x32xf32>
    %480 = vector.broadcast %471 : vector<8x1xf32> to vector<8x32xf32>
    %481 = arith.mulf %480, %462 : vector<8x32xf32>
    %482 = arith.addf %424, %481 : vector<8x32xf32>
    %483 = arith.addf %482, %477 : vector<8x32xf32>
    %c8_i32 = arith.constant 8 : i32
    %484 = arith.sitofp %9 : vector<8x1xi32> to vector<8x1xf32>
    %cst_77 = arith.constant 1.000000e+00 : f32
    %485 = vector.broadcast %cst_77 : f32 to vector<8x1xf32>
    %486 = arith.maximumf %484, %485 : vector<8x1xf32>
    %487 = vector.broadcast %486 : vector<8x1xf32> to vector<8x32xf32>
    %488 = arith.divf %483, %487 : vector<8x32xf32>
    %c0_78 = arith.constant 0 : index
    %c0_79 = arith.constant 0 : index
    %489 = vector.load %arg6[%c0_78, %c0_79] : memref<32x128xf32, #tpu.memory_space<vmem>>, vector<32x128xf32>
    %cst_80 = arith.constant dense<0.000000e+00> : vector<8x128xf32>
    %490 = tpu.matmul %488, %489, %cst_80 {dimension_numbers = #tpu.dot_dimension_numbers<[1], [0], [0], [1], [0, 0, 1, 1], [], []>} : vector<8x32xf32>, vector<32x128xf32>, vector<8x128xf32> -> vector<8x128xf32>
    %c0_81 = arith.constant 0 : index
    %c0_82 = arith.constant 0 : index
    %491 = vector.load %arg7[%c0_81, %c0_82] : memref<1x128xf32, #tpu.memory_space<vmem>>, vector<1x128xf32>
    %492 = vector.broadcast %491 : vector<1x128xf32> to vector<8x128xf32>
    %493 = arith.addf %490, %492 : vector<8x128xf32>
    %c0_83 = arith.constant 0 : index
    %c0_84 = arith.constant 0 : index
    %494 = vector.load %arg8[%c0_83, %c0_84] : memref<8x128xf32, #tpu.memory_space<vmem>>, vector<8x128xf32>
    tpu.vector_store %arg8[%c0_83, %c0_84], %493 {strides = array<i32>} : memref<8x128xf32, #tpu.memory_space<vmem>>, vector<8x128xf32>,
    return
  }
  func.func @transform_0(%arg0: i32) -> (i32, i32, i32) {
    %c0_i32 = arith.constant 0 : i32
    %c0_i32_0 = arith.constant 0 : i32
    %c0_i32_1 = arith.constant 0 : i32
    return %c0_i32, %arg0, %c0_i32_0 : i32, i32, i32
  }
  func.func @transform_1(%arg0: i32) -> (i32, i32) {
    %c0_i32 = arith.constant 0 : i32
    %c0_i32_0 = arith.constant 0 : i32
    return %arg0, %c0_i32 : i32, i32
  }
  func.func @transform_2(%arg0: i32) -> (i32, i32) {
    %c0_i32 = arith.constant 0 : i32
    %c0_i32_0 = arith.constant 0 : i32
    %c0_i32_1 = arith.constant 0 : i32
    return %c0_i32, %c0_i32_0 : i32, i32
  }
  func.func @transform_3(%arg0: i32) -> (i32, i32) {
    %c0_i32 = arith.constant 0 : i32
    %c0_i32_0 = arith.constant 0 : i32
    %c0_i32_1 = arith.constant 0 : i32
    return %c0_i32, %c0_i32_0 : i32, i32
  }
  func.func @transform_4(%arg0: i32) -> (i32, i32) {
    %c0_i32 = arith.constant 0 : i32
    %c0_i32_0 = arith.constant 0 : i32
    %c0_i32_1 = arith.constant 0 : i32
    return %c0_i32, %c0_i32_0 : i32, i32
  }
  func.func @transform_5(%arg0: i32) -> (i32, i32) {
    %c0_i32 = arith.constant 0 : i32
    %c0_i32_0 = arith.constant 0 : i32
    %c0_i32_1 = arith.constant 0 : i32
    return %c0_i32, %c0_i32_0 : i32, i32
  }
  func.func @transform_6(%arg0: i32) -> (i32, i32) {
    %c0_i32 = arith.constant 0 : i32
    %c0_i32_0 = arith.constant 0 : i32
    %c0_i32_1 = arith.constant 0 : i32
    return %c0_i32, %c0_i32_0 : i32, i32
  }
  func.func @transform_7(%arg0: i32) -> (i32, i32) {
    %c0_i32 = arith.constant 0 : i32
    %c0_i32_0 = arith.constant 0 : i32
    return %arg0, %c0_i32 : i32, i32
  }
}

</mosaic_0001>

<llo_original>
// kernel: rnn_forward.1
$region0: #{rnn_forward.1}
  #allocation0 [shape = 'u32[]', space=smem, size = 0x4, offset = 0x4, fixed_abs, tag = 'smem constant byte address 0x4 - core index']
  #allocation1 [shape = 'u32[144,128]{1,0:T(1,128)}', space=vmem, size = 0x12000, scoped, tag = 'internal scratch']
  #allocation2 [shape = 'f32[8,8,256]{2,1,0:T(8,128)}', space=vmem, size = 0x10000, scoped, tag = 'scratch operand']
  %s0 = inlined_call_operand.vmem [shape: f32[8,8,32], index: 0, kind: input, shape index: {}]
  %s1 = inlined_call_operand.vmem [shape: s32[8,1], index: 1, kind: input, shape index: {}]
  %s2 = inlined_call_operand.vmem [shape: f32[32,256], index: 2, kind: input, shape index: {}]
  %s3 = inlined_call_operand.vmem [shape: f32[64,256], index: 3, kind: input, shape index: {}]
  %s4 = inlined_call_operand.vmem [shape: f32[1,256], index: 4, kind: input, shape index: {}]
  %s5 = inlined_call_operand.vmem [shape: f32[32,128], index: 5, kind: input, shape index: {}]
  %s6 = inlined_call_operand.vmem [shape: f32[1,128], index: 6, kind: input, shape index: {}]
  %s7 = inlined_call_operand.hbm [shape: f32[8,128], index: 7, kind: output, shape index: {}]
  %s8 = sld [smem:[#allocation0]]
  $region38: #{rnn_forward.1} parent=0
    _
  %s10 = ssub.s32 1, %s8
  %s11 = scalar_select 0, %s10, %s8
  $region1: #{rnn_forward.1} parent=0
    #allocation3 [shape = 'u8[4096]{0}', space=vmem, size = 0x1000, scoped, tag = 'output window, operand 0, single buffered']
    #allocation4 [shape = 's32[1]{0}', space=sflag, size = 0x4, scoped, tag = 'scoped memory for rnn_forward.1']
    %12 = vsyncpa [#allocation4], 0
    // Predicated region
    $region2: #{rnn_forward.1} parent=1 // pred_check
      _
    $region3: #{rnn_forward.1} parent=1 // pred_check_branch
      %14 = sbr.rel (0) target = $region5
    $region4: #{rnn_forward.1} parent=1 // pred_region
      _
    $region5: #{rnn_forward.1} parent=1 // pred_fallthru
      _
    // Predicated region
    $region6: #{rnn_forward.1} parent=1 // pred_check
      _
    $region7: #{rnn_forward.1} parent=1 // pred_check_branch
      %16 = sbr.rel (0) target = $region9
    $region8: #{rnn_forward.1} parent=1 // pred_region
      _
    $region9: #{rnn_forward.1} parent=1 // pred_fallthru
      _
    // Predicated region
    $region10: #{rnn_forward.1} parent=1 // pred_check
      _
    $region11: #{rnn_forward.1} parent=1 // pred_check_branch
      %18 = sbr.rel (0) target = $region13
    $region12: #{rnn_forward.1} parent=1 // pred_region
      _
    $region13: #{rnn_forward.1} parent=1 // pred_fallthru
      _
    // Predicated region
    $region14: #{rnn_forward.1} parent=1 // pred_check
      _
    $region15: #{rnn_forward.1} parent=1 // pred_check_branch
      %20 = sbr.rel (0) target = $region17
    $region16: #{rnn_forward.1} parent=1 // pred_region
      _
    $region17: #{rnn_forward.1} parent=1 // pred_fallthru
      _
    // Predicated region
    $region18: #{rnn_forward.1} parent=1 // pred_check
      _
    $region19: #{rnn_forward.1} parent=1 // pred_check_branch
      %22 = sbr.rel (0) target = $region21
    $region20: #{rnn_forward.1} parent=1 // pred_region
      _
    $region21: #{rnn_forward.1} parent=1 // pred_fallthru
      _
    // Predicated region
    $region22: #{rnn_forward.1} parent=1 // pred_check
      _
    $region23: #{rnn_forward.1} parent=1 // pred_check_branch
      %24 = sbr.rel (0) target = $region25
    $region24: #{rnn_forward.1} parent=1 // pred_region
      _
    $region25: #{rnn_forward.1} parent=1 // pred_fallthru
      _
    // Predicated region
    $region26: #{rnn_forward.1} parent=1 // pred_check
      _
    $region27: #{rnn_forward.1} parent=1 // pred_check_branch
      %26 = sbr.rel (0) target = $region29
    $region28: #{rnn_forward.1} parent=1 // pred_region
      _
    $region29: #{rnn_forward.1} parent=1 // pred_fallthru
      _
    %v27 = vld [vmem:[%s0] sm:$0xff]
    %v28 = vld [vmem:[%s0 + $0x8] sm:$0xff]
    %v29 = vld [vmem:[%s0 + $0x10] sm:$0xff]
    %v30 = vld [vmem:[%s0 + $0x18] sm:$0xff]
    %v31 = vld [vmem:[%s0 + $0x20] sm:$0xff]
    %v32 = vld [vmem:[%s0 + $0x28] sm:$0xff]
    %v33 = vld [vmem:[%s0 + $0x30] sm:$0xff]
    %v34 = vld [vmem:[%s0 + $0x38] sm:$0xff]
    %v35 = vld [vmem:[%s2] sm:$0xff]
    %v36 = vld [vmem:[%s2 + $0x8] sm:$0xff]
    %v37 = vld [vmem:[%s2 + $0x10] sm:$0xff]
    %v38 = vld [vmem:[%s2 + $0x18] sm:$0xff]
    %v39 = vld [vmem:[%s2 + $0x20] sm:$0xff]
    %v40 = vld [vmem:[%s2 + $0x28] sm:$0xff]
    %v41 = vld [vmem:[%s2 + $0x30] sm:$0xff]
    %v42 = vld [vmem:[%s2 + $0x38] sm:$0xff]
    %v43 = vld [vmem:[%s4] sm:$0x3]
    %v45 = vlaneseq
    %v46 = vshrl.u32 %v45, 7
    %v47 = vsub.s32 0, %v46
    %v48 = vrot.slane %v43, %v47
    %v49 = vlaneseq
    %v50 = vshrl.u32 %v49, 7
    %v51 = vsub.s32 1, %v50
    %v52 = vrot.slane %v43, %v51
    %vm55 = vcmask 261120
    %v57 = vsel %vm55, %v27, 0
    %v60 = vsel %vm55, %v28, 0
    %v63 = vsel %vm55, %v29, 0
    %v66 = vsel %vm55, %v30, 0
    %v69 = vsel %vm55, %v31, 0
    %v72 = vsel %vm55, %v32, 0
    %v75 = vsel %vm55, %v33, 0
    %v78 = vsel %vm55, %v34, 0
    %80 = vmatprep.subr.mxu0 %v36
    %81 = vmatpush1.msra.mxu0 %v35
    %82 = vmatprep.subr.mxu0 %v38
    %83 = vmatpush1.msra.mxu0 %v37
    %84 = vmatprep.subr.mxu0 %v40
    %85 = vmatpush1.msra.mxu0 %v39
    %86 = vmatprep.subr.mxu0 %v42
    %87 = vmatpush1.msra.mxu0 %v41
    %88 = vmatprep.subr.mxu0 0.0
    %89 = vmatpush1.msra.mxu0 0.0
    %90 = vmatprep.subr.mxu0 0.0
    %91 = vmatpush1.msra.mxu0 0.0
    %92 = vmatprep.subr.mxu0 0.0
    %93 = vmatpush1.msra.mxu0 0.0
    %94 = vmatprep.subr.mxu0 0.0
    %95 = vmatpush1.msra.mxu0 0.0
    %96 = vmatprep.subr.mxu0 0.0
    %97 = vmatpush1.msra.mxu0 0.0
    %98 = vmatprep.subr.mxu0 0.0
    %99 = vmatpush1.msra.mxu0 0.0
    %100 = vmatprep.subr.mxu0 0.0
    %101 = vmatpush1.msra.mxu0 0.0
    %102 = vmatprep.subr.mxu0 0.0
    %103 = vmatpush1.msra.mxu0 0.0
    %104 = vmatprep.subr.mxu0 0.0
    %105 = vmatpush1.msra.mxu0 0.0
    %106 = vmatprep.subr.mxu0 0.0
    %107 = vmatpush1.msra.mxu0 0.0
    %108 = vmatprep.subr.mxu0 0.0
    %109 = vmatpush1.msra.mxu0 0.0
    %110 = vmatprep.subr.mxu0 0.0
    %111 = vmatpush1.msra.mxu0 0.0
    %112 = vmatprep.subr.mxu0 0.0
    %113 = vmatpush1.msra.mxu0 0.0
    %114 = vmatprep.subr.mxu0 0.0
    %115 = vmatpush1.msra.mxu0 0.0
    %116 = vmatprep.subr.mxu0 0.0
    %117 = vmatpush1.msra.mxu0 0.0
    %118 = vmatprep.subr.mxu0 0.0
    %119 = vmatpush1.msra.mxu0 0.0
    %120 = vmatprep.subr.mxu0 0.0
    %121 = vmatpush1.msra.mxu0 0.0
    %122 = vmatprep.subr.mxu0 0.0
    %123 = vmatpush1.msra.mxu0 0.0
    %124 = vmatprep.subr.mxu0 0.0
    %125 = vmatpush1.msra.mxu0 0.0
    %126 = vmatprep.subr.mxu0 0.0
    %127 = vmatpush1.msra.mxu0 0.0
    %128 = vmatprep.subr.mxu0 0.0
    %129 = vmatpush1.msra.mxu0 0.0
    %130 = vmatprep.subr.mxu0 0.0
    %131 = vmatpush1.msra.mxu0 0.0
    %132 = vmatprep.subr.mxu0 0.0
    %133 = vmatpush1.msra.mxu0 0.0
    %134 = vmatprep.subr.mxu0 0.0
    %135 = vmatpush1.msra.mxu0 0.0
    %136 = vmatprep.subr.mxu0 0.0
    %137 = vmatpush1.msra.mxu0 0.0
    %138 = vmatprep.subr.mxu0 0.0
    %139 = vmatpush1.msra.mxu0 0.0
    %140 = vmatprep.subr.mxu0 0.0
    %141 = vmatpush1.msra.mxu0 0.0
    %142 = vmatprep.subr.mxu0 0.0
    %143 = vmatpush1.msra.mxu0 0.0
    %144 = vmatprep.mubr.f32.mxu0 0.0
    %145 = vmatmul.mubr.f32.gmra.mrb[0].mxu0 %v57
    %v146 = vpop.f32.mrb[0].mxu0
    %v147 = vadd.f32 %v48, %v146
    %v148 = vpop.f32.mrb[0].mxu0
    %v149 = vadd.f32 %v52, %v148
    %150 = vmatprep.mubr.f32.mxu0 0.0
    %151 = vmatmul.mubr.f32.gmra.mrb[0].mxu0 %v60
    %v152 = vpop.f32.mrb[0].mxu0
    %v153 = vadd.f32 %v48, %v152
    %v154 = vpop.f32.mrb[0].mxu0
    %v155 = vadd.f32 %v52, %v154
    %156 = vmatprep.mubr.f32.mxu0 0.0
    %157 = vmatmul.mubr.f32.gmra.mrb[0].mxu0 %v63
    %v158 = vpop.f32.mrb[0].mxu0
    %v159 = vadd.f32 %v48, %v158
    %v160 = vpop.f32.mrb[0].mxu0
    %v161 = vadd.f32 %v52, %v160
    %162 = vmatprep.mubr.f32.mxu0 0.0
    %163 = vmatmul.mubr.f32.gmra.mrb[0].mxu0 %v66
    %v164 = vpop.f32.mrb[0].mxu0
    %v165 = vadd.f32 %v48, %v164
    %v166 = vpop.f32.mrb[0].mxu0
    %v167 = vadd.f32 %v52, %v166
    %168 = vmatprep.mubr.f32.mxu0 0.0
    %169 = vmatmul.mubr.f32.gmra.mrb[0].mxu0 %v69
    %v170 = vpop.f32.mrb[0].mxu0
    %v171 = vadd.f32 %v48, %v170
    %v172 = vpop.f32.mrb[0].mxu0
    %v173 = vadd.f32 %v52, %v172
    %174 = vmatprep.mubr.f32.mxu0 0.0
    %175 = vmatmul.mubr.f32.gmra.mrb[0].mxu0 %v72
    %v176 = vpop.f32.mrb[0].mxu0
    %v177 = vadd.f32 %v48, %v176
    %v178 = vpop.f32.mrb[0].mxu0
    %v179 = vadd.f32 %v52, %v178
    %180 = vmatprep.mubr.f32.mxu0 0.0
    %181 = vmatmul.mubr.f32.gmra.mrb[0].mxu0 %v75
    %v182 = vpop.f32.mrb[0].mxu0
    %v183 = vadd.f32 %v48, %v182
    %v184 = vpop.f32.mrb[0].mxu0
    %v185 = vadd.f32 %v52, %v184
    %186 = vmatprep.mubr.f32.mxu0 0.0
    %187 = vmatmul.mubr.f32.gmra.mrb[0].mxu0 %v78
    %v188 = vpop.f32.mrb[0].mxu0
    %v189 = vadd.f32 %v48, %v188
    %v190 = vpop.f32.mrb[0].mxu0
    %v191 = vadd.f32 %v52, %v190
    %192 = vdwg.mxu0
    %193 = vst [vmem:[#allocation2] sm:$0xff] %v147
    %194 = vst [vmem:[#allocation2 + $0x8] sm:$0xff] %v149
    %195 = vst [vmem:[#allocation2 + $0x10] sm:$0xff] %v153
    %196 = vst [vmem:[#allocation2 + $0x18] sm:$0xff] %v155
    %197 = vst [vmem:[#allocation2 + $0x20] sm:$0xff] %v159
    %198 = vst [vmem:[#allocation2 + $0x28] sm:$0xff] %v161
    %199 = vst [vmem:[#allocation2 + $0x30] sm:$0xff] %v165
    %200 = vst [vmem:[#allocation2 + $0x38] sm:$0xff] %v167
    %201 = vst [vmem:[#allocation2 + $0x40] sm:$0xff] %v171
    %202 = vst [vmem:[#allocation2 + $0x48] sm:$0xff] %v173
    %203 = vst [vmem:[#allocation2 + $0x50] sm:$0xff] %v177
    %204 = vst [vmem:[#allocation2 + $0x58] sm:$0xff] %v179
    %205 = vst [vmem:[#allocation2 + $0x60] sm:$0xff] %v183
    %206 = vst [vmem:[#allocation2 + $0x68] sm:$0xff] %v185
    %207 = vst [vmem:[#allocation2 + $0x70] sm:$0xff] %v189
    %208 = vst [vmem:[#allocation2 + $0x78] sm:$0xff] %v191
    %v209 = vld [vmem:[%s1] sm:$0xff]
    %v210 = vld [vmem:[%s3] sm:$0xff]
    %v211 = vld [vmem:[%s3 + $0x8] sm:$0xff]
    %v212 = vld [vmem:[%s3 + $0x10] sm:$0xff]
    %v213 = vld [vmem:[%s3 + $0x18] sm:$0xff]
    %v214 = vld [vmem:[%s3 + $0x20] sm:$0xff]
    %v215 = vld [vmem:[%s3 + $0x28] sm:$0xff]
    %v216 = vld [vmem:[%s3 + $0x30] sm:$0xff]
    %v217 = vld [vmem:[%s3 + $0x38] sm:$0xff]
    %v218 = vld [vmem:[%s3 + $0x40] sm:$0xff]
    %v219 = vld [vmem:[%s3 + $0x48] sm:$0xff]
    %v220 = vld [vmem:[%s3 + $0x50] sm:$0xff]
    %v221 = vld [vmem:[%s3 + $0x58] sm:$0xff]
    %v222 = vld [vmem:[%s3 + $0x60] sm:$0xff]
    %v223 = vld [vmem:[%s3 + $0x68] sm:$0xff]
    %v224 = vld [vmem:[%s3 + $0x70] sm:$0xff]
    %v225 = vld [vmem:[%s3 + $0x78] sm:$0xff]
    %vm226 = vcmask 523264
    %v228 = vsel %vm226, 0.0, 0
    %230 = vmatprep.subr.mxu0 %v211
    %231 = vmatpush1.msra.mxu0 %v210
    %232 = vmatprep.subr.mxu0 %v213
    %233 = vmatpush1.msra.mxu0 %v212
    %234 = vmatprep.subr.mxu0 %v215
    %235 = vmatpush1.msra.mxu0 %v214
    %236 = vmatprep.subr.mxu0 %v217
    %237 = vmatpush1.msra.mxu0 %v216
    %238 = vmatprep.subr.mxu0 %v219
    %239 = vmatpush1.msra.mxu0 %v218
    %240 = vmatprep.subr.mxu0 %v221
    %241 = vmatpush1.msra.mxu0 %v220
    %242 = vmatprep.subr.mxu0 %v223
    %243 = vmatpush1.msra.mxu0 %v222
    %244 = vmatprep.subr.mxu0 %v225
    %245 = vmatpush1.msra.mxu0 %v224
    %246 = vmatprep.subr.mxu0 0.0
    %247 = vmatpush1.msra.mxu0 0.0
    %248 = vmatprep.subr.mxu0 0.0
    %249 = vmatpush1.msra.mxu0 0.0
    %250 = vmatprep.subr.mxu0 0.0
    %251 = vmatpush1.msra.mxu0 0.0
    %252 = vmatprep.subr.mxu0 0.0
    %253 = vmatpush1.msra.mxu0 0.0
    %254 = vmatprep.subr.mxu0 0.0
    %255 = vmatpush1.msra.mxu0 0.0
    %256 = vmatprep.subr.mxu0 0.0
    %257 = vmatpush1.msra.mxu0 0.0
    %258 = vmatprep.subr.mxu0 0.0
    %259 = vmatpush1.msra.mxu0 0.0
    %260 = vmatprep.subr.mxu0 0.0
    %261 = vmatpush1.msra.mxu0 0.0
    %262 = vmatprep.subr.mxu0 0.0
    %263 = vmatpush1.msra.mxu0 0.0
    %264 = vmatprep.subr.mxu0 0.0
    %265 = vmatpush1.msra.mxu0 0.0
    %266 = vmatprep.subr.mxu0 0.0
    %267 = vmatpush1.msra.mxu0 0.0
    %268 = vmatprep.subr.mxu0 0.0
    %269 = vmatpush1.msra.mxu0 0.0
    %270 = vmatprep.subr.mxu0 0.0
    %271 = vmatpush1.msra.mxu0 0.0
    %272 = vmatprep.subr.mxu0 0.0
    %273 = vmatpush1.msra.mxu0 0.0
    %274 = vmatprep.subr.mxu0 0.0
    %275 = vmatpush1.msra.mxu0 0.0
    %276 = vmatprep.subr.mxu0 0.0
    %277 = vmatpush1.msra.mxu0 0.0
    %278 = vmatprep.subr.mxu0 0.0
    %279 = vmatpush1.msra.mxu0 0.0
    %280 = vmatprep.subr.mxu0 0.0
    %281 = vmatpush1.msra.mxu0 0.0
    %282 = vmatprep.subr.mxu0 0.0
    %283 = vmatpush1.msra.mxu0 0.0
    %284 = vmatprep.subr.mxu0 0.0
    %285 = vmatpush1.msra.mxu0 0.0
    %286 = vmatprep.subr.mxu0 0.0
    %287 = vmatpush1.msra.mxu0 0.0
    %288 = vmatprep.subr.mxu0 0.0
    %289 = vmatpush1.msra.mxu0 0.0
    %290 = vmatprep.subr.mxu0 0.0
    %291 = vmatpush1.msra.mxu0 0.0
    %292 = vmatprep.subr.mxu0 0.0
    %293 = vmatpush1.msra.mxu0 0.0
    %294 = vmatprep.mubr.f32.mxu0 0.0
    %295 = vmatmul.mubr.f32.gmra.mrb[0].mxu0 %v228
    %v296 = vpop.f32.mrb[0].mxu0
    %v297 = vadd.f32 0.0, %v296
    %v298 = vpop.f32.mrb[0].mxu0
    %v299 = vadd.f32 0.0, %v298
    %300 = vdwg.mxu0
    %v301 = vld [vmem:[#allocation2] sm:$0xff]
    %v302 = vadd.f32 %v297, %v301
    %s303 = scalar_lea.vmem [#allocation2], 112
    %v304 = vld [vmem:[%s303 + $0x8] sm:$0xff]
    %v305 = vadd.f32 %v299, %v304
    %v306 = vxor.u32 %v302, 2147483648
    %v307 = vmul.f32 %v306, 1.442695
    %v308 = vpow.pop %v307
    %v309 = vadd.f32 %v308, 1.0
    %v310 = vrcp.pop %v309
    %v311 = vmul.f32 1.0, %v310
    %v312 = vtanh.pop %v302
    %v313 = vxor.u32 %v305, 2147483648
    %v314 = vmul.f32 %v313, 1.442695
    %v315 = vpow.pop %v314
    %v316 = vadd.f32 %v315, 1.0
    %v317 = vrcp.pop %v316
    %v318 = vmul.f32 1.0, %v317
    %v319 = vtanh.pop %v305
    %v320 = vmul.f32 %v311, 0.0
    %322 = vrot.lane.b32.xlu0 %v312, 64
    %v323 = vpop.permute.xlu0 %322
    %v325 = vmul.f32 %v311, %v323
    %327 = vrot.lane.b32.xlu0 %v325, 32
    %v328 = vpop.permute.xlu0 %327
    %v330 = vadd.f32 %v320, %v328
    %v331 = vtanh.pop %v330
    %333 = vrot.lane.b32.xlu0 %v331, 64
    %v334 = vpop.permute.xlu0 %333
    %v336 = vmul.f32 %v311, %v334
    %v337 = vmul.f32 %v318, 0.0
    %339 = vrot.lane.b32.xlu0 %v319, 64
    %v340 = vpop.permute.xlu0 %339
    %v342 = vmul.f32 %v318, %v340
    %344 = vrot.lane.b32.xlu0 %v342, 32
    %v345 = vpop.permute.xlu0 %344
    %v347 = vadd.f32 %v337, %v345
    %v348 = vtanh.pop %v347
    %350 = vrot.lane.b32.xlu0 %v348, 64
    %v351 = vpop.permute.xlu0 %350
    %v353 = vmul.f32 %v318, %v351
    %vm354 = vcmp.gt.s32.totalorder %v209, 0
    %v355 = vsel %vm354, 1, 0
    %v356 = vcvt.s32.f32 %v355
    %vm357 = vcmp.gt.s32.totalorder %v209, 7
    %v358 = vsel %vm357, 1, 0
    %v359 = vcvt.s32.f32 %v358
    %361 = vset.pattern.permute.xlu0 0
    %362 = vperm.xlu0 %361, %v359
    %v363 = vpop.permute.xlu0 %362
    %v365 = vmul.f32 %v363, %v353
    %v366 = vmul.f32 %v363, %v347
    %368 = vset.pattern.permute.xlu0 0
    %369 = vperm.xlu0 %368, %v356
    %v370 = vpop.permute.xlu0 %369
    %v372 = vmul.f32 %v370, %v336
    %v373 = vadd.f32 %v372, 0.0
    %v374 = vadd.f32 %v373, %v365
    %376 = vrot.lane.b32.xlu0 %v336, 32
    %v377 = vpop.permute.xlu0 %376
    %380 = vrot.lane.b32.xlu0 %v365, 64
    %v381 = vpop.permute.xlu0 %380
    %v383 = vsel %vm55, %v377, %v381
    %v385 = vsel %vm226, %v383, 0
    %387 = vmatprep.subr.mxu0 %v211
    %388 = vmatpush1.msra.mxu0 %v210
    %389 = vmatprep.subr.mxu0 %v213
    %390 = vmatpush1.msra.mxu0 %v212
    %391 = vmatprep.subr.mxu0 %v215
    %392 = vmatpush1.msra.mxu0 %v214
    %393 = vmatprep.subr.mxu0 %v217
    %394 = vmatpush1.msra.mxu0 %v216
    %395 = vmatprep.subr.mxu0 %v219
    %396 = vmatpush1.msra.mxu0 %v218
    %397 = vmatprep.subr.mxu0 %v221
    %398 = vmatpush1.msra.mxu0 %v220
    %399 = vmatprep.subr.mxu0 %v223
    %400 = vmatpush1.msra.mxu0 %v222
    %401 = vmatprep.subr.mxu0 %v225
    %402 = vmatpush1.msra.mxu0 %v224
    %403 = vmatprep.subr.mxu0 0.0
    %404 = vmatpush1.msra.mxu0 0.0
    %405 = vmatprep.subr.mxu0 0.0
    %406 = vmatpush1.msra.mxu0 0.0
    %407 = vmatprep.subr.mxu0 0.0
    %408 = vmatpush1.msra.mxu0 0.0
    %409 = vmatprep.subr.mxu0 0.0
    %410 = vmatpush1.msra.mxu0 0.0
    %411 = vmatprep.subr.mxu0 0.0
    %412 = vmatpush1.msra.mxu0 0.0
    %413 = vmatprep.subr.mxu0 0.0
    %414 = vmatpush1.msra.mxu0 0.0
    %415 = vmatprep.subr.mxu0 0.0
    %416 = vmatpush1.msra.mxu0 0.0
    %417 = vmatprep.subr.mxu0 0.0
    %418 = vmatpush1.msra.mxu0 0.0
    %419 = vmatprep.subr.mxu0 0.0
    %420 = vmatpush1.msra.mxu0 0.0
    %421 = vmatprep.subr.mxu0 0.0
    %422 = vmatpush1.msra.mxu0 0.0
    %423 = vmatprep.subr.mxu0 0.0
    %424 = vmatpush1.msra.mxu0 0.0
    %425 = vmatprep.subr.mxu0 0.0
    %426 = vmatpush1.msra.mxu0 0.0
    %427 = vmatprep.subr.mxu0 0.0
    %428 = vmatpush1.msra.mxu0 0.0
    %429 = vmatprep.subr.mxu0 0.0
    %430 = vmatpush1.msra.mxu0 0.0
    %431 = vmatprep.subr.mxu0 0.0
    %432 = vmatpush1.msra.mxu0 0.0
    %433 = vmatprep.subr.mxu0 0.0
    %434 = vmatpush1.msra.mxu0 0.0
    %435 = vmatprep.subr.mxu0 0.0
    %436 = vmatpush1.msra.mxu0 0.0
    %437 = vmatprep.subr.mxu0 0.0
    %438 = vmatpush1.msra.mxu0 0.0
    %439 = vmatprep.subr.mxu0 0.0
    %440 = vmatpush1.msra.mxu0 0.0
    %441 = vmatprep.subr.mxu0 0.0
    %442 = vmatpush1.msra.mxu0 0.0
    %443 = vmatprep.subr.mxu0 0.0
    %444 = vmatpush1.msra.mxu0 0.0
    %445 = vmatprep.subr.mxu0 0.0
    %446 = vmatpush1.msra.mxu0 0.0
    %447 = vmatprep.subr.mxu0 0.0
    %448 = vmatpush1.msra.mxu0 0.0
    %449 = vmatprep.subr.mxu0 0.0
    %450 = vmatpush1.msra.mxu0 0.0
    %451 = vmatprep.mubr.f32.mxu0 0.0
    %452 = vmatmul.mubr.f32.gmra.mrb[0].mxu0 %v385
    %v453 = vpop.f32.mrb[0].mxu0
    %v454 = vadd.f32 0.0, %v453
    %v455 = vpop.f32.mrb[0].mxu0
    %v456 = vadd.f32 0.0, %v455
    %457 = vdwg.mxu0
    %s458 = scalar_lea.vmem [#allocation2], 16
    %v459 = vld [vmem:[%s458] sm:$0xff]
    %v460 = vadd.f32 %v454, %v459
    %s461 = scalar_lea.vmem [#allocation2], 96
    %v462 = vld [vmem:[%s461 + $0x8] sm:$0xff]
    %v463 = vadd.f32 %v456, %v462
    %v464 = vxor.u32 %v460, 2147483648
    %v465 = vmul.f32 %v464, 1.442695
    %v466 = vpow.pop %v465
    %v467 = vadd.f32 %v466, 1.0
    %v468 = vrcp.pop %v467
    %v469 = vmul.f32 1.0, %v468
    %v470 = vtanh.pop %v460
    %v471 = vxor.u32 %v463, 2147483648
    %v472 = vmul.f32 %v471, 1.442695
    %v473 = vpow.pop %v472
    %v474 = vadd.f32 %v473, 1.0
    %v475 = vrcp.pop %v474
    %v476 = vmul.f32 1.0, %v475
    %v477 = vtanh.pop %v463
    %v478 = vmul.f32 %v469, %v330
    %480 = vrot.lane.b32.xlu0 %v470, 64
    %v481 = vpop.permute.xlu0 %480
    %v483 = vmul.f32 %v469, %v481
    %485 = vrot.lane.b32.xlu0 %v483, 32
    %v486 = vpop.permute.xlu0 %485
    %v488 = vadd.f32 %v478, %v486
    %v489 = vtanh.pop %v488
    %491 = vrot.lane.b32.xlu0 %v489, 64
    %v492 = vpop.permute.xlu0 %491
    %v494 = vmul.f32 %v469, %v492
    %v495 = vmul.f32 %v476, %v366
    %497 = vrot.lane.b32.xlu0 %v477, 64
    %v498 = vpop.permute.xlu0 %497
    %v500 = vmul.f32 %v476, %v498
    %502 = vrot.lane.b32.xlu0 %v500, 32
    %v503 = vpop.permute.xlu0 %502
    %v505 = vadd.f32 %v495, %v503
    %v506 = vtanh.pop %v505
    %508 = vrot.lane.b32.xlu0 %v506, 64
    %v509 = vpop.permute.xlu0 %508
    %v511 = vmul.f32 %v476, %v509
    %vm512 = vcmp.gt.s32.totalorder %v209, 1
    %v513 = vsel %vm512, 1, 0
    %v514 = vcvt.s32.f32 %v513
    %vm515 = vcmp.gt.s32.totalorder %v209, 6
    %v516 = vsel %vm515, 1, 0
    %v517 = vcvt.s32.f32 %v516
    %519 = vset.pattern.permute.xlu0 0
    %520 = vperm.xlu0 %519, %v517
    %v521 = vpop.permute.xlu0 %520
    %v523 = vmul.f32 %v521, %v511
    %v524 = vmul.f32 %v521, %v505
    %526 = vset.pattern.permute.xlu0 0
    %527 = vperm.xlu0 %526, %v514
    %v528 = vpop.permute.xlu0 %527
    %v530 = vmul.f32 %v528, %v494
    %v531 = vadd.f32 %v374, %v530
    %v532 = vadd.f32 %v531, %v523
    %534 = vrot.lane.b32.xlu0 %v494, 32
    %v535 = vpop.permute.xlu0 %534
    %538 = vrot.lane.b32.xlu0 %v523, 64
    %v539 = vpop.permute.xlu0 %538
    %v541 = vsel %vm55, %v535, %v539
    %v543 = vsel %vm226, %v541, 0
    %545 = vmatprep.subr.mxu0 %v211
    %546 = vmatpush1.msra.mxu0 %v210
    %547 = vmatprep.subr.mxu0 %v213
    %548 = vmatpush1.msra.mxu0 %v212
    %549 = vmatprep.subr.mxu0 %v215
    %550 = vmatpush1.msra.mxu0 %v214
    %551 = vmatprep.subr.mxu0 %v217
    %552 = vmatpush1.msra.mxu0 %v216
    %553 = vmatprep.subr.mxu0 %v219
    %554 = vmatpush1.msra.mxu0 %v218
    %555 = vmatprep.subr.mxu0 %v221
    %556 = vmatpush1.msra.mxu0 %v220
    %557 = vmatprep.subr.mxu0 %v223
    %558 = vmatpush1.msra.mxu0 %v222
    %559 = vmatprep.subr.mxu0 %v225
    %560 = vmatpush1.msra.mxu0 %v224
    %561 = vmatprep.subr.mxu0 0.0
    %562 = vmatpush1.msra.mxu0 0.0
    %563 = vmatprep.subr.mxu0 0.0
    %564 = vmatpush1.msra.mxu0 0.0
    %565 = vmatprep.subr.mxu0 0.0
    %566 = vmatpush1.msra.mxu0 0.0
    %567 = vmatprep.subr.mxu0 0.0
    %568 = vmatpush1.msra.mxu0 0.0
    %569 = vmatprep.subr.mxu0 0.0
    %570 = vmatpush1.msra.mxu0 0.0
    %571 = vmatprep.subr.mxu0 0.0
    %572 = vmatpush1.msra.mxu0 0.0
    %573 = vmatprep.subr.mxu0 0.0
    %574 = vmatpush1.msra.mxu0 0.0
    %575 = vmatprep.subr.mxu0 0.0
    %576 = vmatpush1.msra.mxu0 0.0
    %577 = vmatprep.subr.mxu0 0.0
    %578 = vmatpush1.msra.mxu0 0.0
    %579 = vmatprep.subr.mxu0 0.0
    %580 = vmatpush1.msra.mxu0 0.0
    %581 = vmatprep.subr.mxu0 0.0
    %582 = vmatpush1.msra.mxu0 0.0
    %583 = vmatprep.subr.mxu0 0.0
    %584 = vmatpush1.msra.mxu0 0.0
    %585 = vmatprep.subr.mxu0 0.0
    %586 = vmatpush1.msra.mxu0 0.0
    %587 = vmatprep.subr.mxu0 0.0
    %588 = vmatpush1.msra.mxu0 0.0
    %589 = vmatprep.subr.mxu0 0.0
    %590 = vmatpush1.msra.mxu0 0.0
    %591 = vmatprep.subr.mxu0 0.0
    %592 = vmatpush1.msra.mxu0 0.0
    %593 = vmatprep.subr.mxu0 0.0
    %594 = vmatpush1.msra.mxu0 0.0
    %595 = vmatprep.subr.mxu0 0.0
    %596 = vmatpush1.msra.mxu0 0.0
    %597 = vmatprep.subr.mxu0 0.0
    %598 = vmatpush1.msra.mxu0 0.0
    %599 = vmatprep.subr.mxu0 0.0
    %600 = vmatpush1.msra.mxu0 0.0
    %601 = vmatprep.subr.mxu0 0.0
    %602 = vmatpush1.msra.mxu0 0.0
    %603 = vmatprep.subr.mxu0 0.0
    %604 = vmatpush1.msra.mxu0 0.0
    %605 = vmatprep.subr.mxu0 0.0
    %606 = vmatpush1.msra.mxu0 0.0
    %607 = vmatprep.subr.mxu0 0.0
    %608 = vmatpush1.msra.mxu0 0.0
    %609 = vmatprep.mubr.f32.mxu0 0.0
    %610 = vmatmul.mubr.f32.gmra.mrb[0].mxu0 %v543
    %v611 = vpop.f32.mrb[0].mxu0
    %v612 = vadd.f32 0.0, %v611
    %v613 = vpop.f32.mrb[0].mxu0
    %v614 = vadd.f32 0.0, %v613
    %615 = vdwg.mxu0
    %s616 = scalar_lea.vmem [#allocation2], 32
    %v617 = vld [vmem:[%s616] sm:$0xff]
    %v618 = vadd.f32 %v612, %v617
    %s619 = scalar_lea.vmem [#allocation2], 80
    %v620 = vld [vmem:[%s619 + $0x8] sm:$0xff]
    %v621 = vadd.f32 %v614, %v620
    %v622 = vxor.u32 %v618, 2147483648
    %v623 = vmul.f32 %v622, 1.442695
    %v624 = vpow.pop %v623
    %v625 = vadd.f32 %v624, 1.0
    %v626 = vrcp.pop %v625
    %v627 = vmul.f32 1.0, %v626
    %v628 = vtanh.pop %v618
    %v629 = vxor.u32 %v621, 2147483648
    %v630 = vmul.f32 %v629, 1.442695
    %v631 = vpow.pop %v630
    %v632 = vadd.f32 %v631, 1.0
    %v633 = vrcp.pop %v632
    %v634 = vmul.f32 1.0, %v633
    %v635 = vtanh.pop %v621
    %v636 = vmul.f32 %v627, %v488
    %638 = vrot.lane.b32.xlu0 %v628, 64
    %v639 = vpop.permute.xlu0 %638
    %v641 = vmul.f32 %v627, %v639
    %643 = vrot.lane.b32.xlu0 %v641, 32
    %v644 = vpop.permute.xlu0 %643
    %v646 = vadd.f32 %v636, %v644
    %v647 = vtanh.pop %v646
    %649 = vrot.lane.b32.xlu0 %v647, 64
    %v650 = vpop.permute.xlu0 %649
    %v652 = vmul.f32 %v627, %v650
    %v653 = vmul.f32 %v634, %v524
    %655 = vrot.lane.b32.xlu0 %v635, 64
    %v656 = vpop.permute.xlu0 %655
    %v658 = vmul.f32 %v634, %v656
    %660 = vrot.lane.b32.xlu0 %v658, 32
    %v661 = vpop.permute.xlu0 %660
    %v663 = vadd.f32 %v653, %v661
    %v664 = vtanh.pop %v663
    %666 = vrot.lane.b32.xlu0 %v664, 64
    %v667 = vpop.permute.xlu0 %666
    %v669 = vmul.f32 %v634, %v667
    %vm670 = vcmp.gt.s32.totalorder %v209, 2
    %v671 = vsel %vm670, 1, 0
    %v672 = vcvt.s32.f32 %v671
    %vm673 = vcmp.gt.s32.totalorder %v209, 5
    %v674 = vsel %vm673, 1, 0
    %v675 = vcvt.s32.f32 %v674
    %677 = vset.pattern.permute.xlu0 0
    %678 = vperm.xlu0 %677, %v675
    %v679 = vpop.permute.xlu0 %678
    %v681 = vmul.f32 %v679, %v669
    %v682 = vmul.f32 %v679, %v663
    %684 = vset.pattern.permute.xlu0 0
    %685 = vperm.xlu0 %684, %v672
    %v686 = vpop.permute.xlu0 %685
    %v688 = vmul.f32 %v686, %v652
    %v689 = vadd.f32 %v532, %v688
    %v690 = vadd.f32 %v689, %v681
    %692 = vrot.lane.b32.xlu0 %v652, 32
    %v693 = vpop.permute.xlu0 %692
    %696 = vrot.lane.b32.xlu0 %v681, 64
    %v697 = vpop.permute.xlu0 %696
    %v699 = vsel %vm55, %v693, %v697
    %v701 = vsel %vm226, %v699, 0
    %703 = vmatprep.subr.mxu0 %v211
    %704 = vmatpush1.msra.mxu0 %v210
    %705 = vmatprep.subr.mxu0 %v213
    %706 = vmatpush1.msra.mxu0 %v212
    %707 = vmatprep.subr.mxu0 %v215
    %708 = vmatpush1.msra.mxu0 %v214
    %709 = vmatprep.subr.mxu0 %v217
    %710 = vmatpush1.msra.mxu0 %v216
    %711 = vmatprep.subr.mxu0 %v219
    %712 = vmatpush1.msra.mxu0 %v218
    %713 = vmatprep.subr.mxu0 %v221
    %714 = vmatpush1.msra.mxu0 %v220
    %715 = vmatprep.subr.mxu0 %v223
    %716 = vmatpush1.msra.mxu0 %v222
    %717 = vmatprep.subr.mxu0 %v225
    %718 = vmatpush1.msra.mxu0 %v224
    %719 = vmatprep.subr.mxu0 0.0
    %720 = vmatpush1.msra.mxu0 0.0
    %721 = vmatprep.subr.mxu0 0.0
    %722 = vmatpush1.msra.mxu0 0.0
    %723 = vmatprep.subr.mxu0 0.0
    %724 = vmatpush1.msra.mxu0 0.0
    %725 = vmatprep.subr.mxu0 0.0
    %726 = vmatpush1.msra.mxu0 0.0
    %727 = vmatprep.subr.mxu0 0.0
    %728 = vmatpush1.msra.mxu0 0.0
    %729 = vmatprep.subr.mxu0 0.0
    %730 = vmatpush1.msra.mxu0 0.0
    %731 = vmatprep.subr.mxu0 0.0
    %732 = vmatpush1.msra.mxu0 0.0
    %733 = vmatprep.subr.mxu0 0.0
    %734 = vmatpush1.msra.mxu0 0.0
    %735 = vmatprep.subr.mxu0 0.0
    %736 = vmatpush1.msra.mxu0 0.0
    %737 = vmatprep.subr.mxu0 0.0
    %738 = vmatpush1.msra.mxu0 0.0
    %739 = vmatprep.subr.mxu0 0.0
    %740 = vmatpush1.msra.mxu0 0.0
    %741 = vmatprep.subr.mxu0 0.0
    %742 = vmatpush1.msra.mxu0 0.0
    %743 = vmatprep.subr.mxu0 0.0
    %744 = vmatpush1.msra.mxu0 0.0
    %745 = vmatprep.subr.mxu0 0.0
    %746 = vmatpush1.msra.mxu0 0.0
    %747 = vmatprep.subr.mxu0 0.0
    %748 = vmatpush1.msra.mxu0 0.0
    %749 = vmatprep.subr.mxu0 0.0
    %750 = vmatpush1.msra.mxu0 0.0
    %751 = vmatprep.subr.mxu0 0.0
    %752 = vmatpush1.msra.mxu0 0.0
    %753 = vmatprep.subr.mxu0 0.0
    %754 = vmatpush1.msra.mxu0 0.0
    %755 = vmatprep.subr.mxu0 0.0
    %756 = vmatpush1.msra.mxu0 0.0
    %757 = vmatprep.subr.mxu0 0.0
    %758 = vmatpush1.msra.mxu0 0.0
    %759 = vmatprep.subr.mxu0 0.0
    %760 = vmatpush1.msra.mxu0 0.0
    %761 = vmatprep.subr.mxu0 0.0
    %762 = vmatpush1.msra.mxu0 0.0
    %763 = vmatprep.subr.mxu0 0.0
    %764 = vmatpush1.msra.mxu0 0.0
    %765 = vmatprep.subr.mxu0 0.0
    %766 = vmatpush1.msra.mxu0 0.0
    %767 = vmatprep.mubr.f32.mxu0 0.0
    %768 = vmatmul.mubr.f32.gmra.mrb[0].mxu0 %v701
    %v769 = vpop.f32.mrb[0].mxu0
    %v770 = vadd.f32 0.0, %v769
    %v771 = vpop.f32.mrb[0].mxu0
    %v772 = vadd.f32 0.0, %v771
    %773 = vdwg.mxu0
    %s774 = scalar_lea.vmem [#allocation2], 48
    %v775 = vld [vmem:[%s774] sm:$0xff]
    %v776 = vadd.f32 %v770, %v775
    %s777 = scalar_lea.vmem [#allocation2], 64
    %v778 = vld [vmem:[%s777 + $0x8] sm:$0xff]
    %v779 = vadd.f32 %v772, %v778
    %v780 = vxor.u32 %v776, 2147483648
    %v781 = vmul.f32 %v780, 1.442695
    %v782 = vpow.pop %v781
    %v783 = vadd.f32 %v782, 1.0
    %v784 = vrcp.pop %v783
    %v785 = vmul.f32 1.0, %v784
    %v786 = vtanh.pop %v776
    %v787 = vxor.u32 %v779, 2147483648
    %v788 = vmul.f32 %v787, 1.442695
    %v789 = vpow.pop %v788
    %v790 = vadd.f32 %v789, 1.0
    %v791 = vrcp.pop %v790
    %v792 = vmul.f32 1.0, %v791
    %v793 = vtanh.pop %v779
    %v794 = vmul.f32 %v785, %v646
    %796 = vrot.lane.b32.xlu0 %v786, 64
    %v797 = vpop.permute.xlu0 %796
    %v799 = vmul.f32 %v785, %v797
    %801 = vrot.lane.b32.xlu0 %v799, 32
    %v802 = vpop.permute.xlu0 %801
    %v804 = vadd.f32 %v794, %v802
    %v805 = vtanh.pop %v804
    %807 = vrot.lane.b32.xlu0 %v805, 64
    %v808 = vpop.permute.xlu0 %807
    %v810 = vmul.f32 %v785, %v808
    %v811 = vmul.f32 %v792, %v682
    %813 = vrot.lane.b32.xlu0 %v793, 64
    %v814 = vpop.permute.xlu0 %813
    %v816 = vmul.f32 %v792, %v814
    %818 = vrot.lane.b32.xlu0 %v816, 32
    %v819 = vpop.permute.xlu0 %818
    %v821 = vadd.f32 %v811, %v819
    %v822 = vtanh.pop %v821
    %824 = vrot.lane.b32.xlu0 %v822, 64
    %v825 = vpop.permute.xlu0 %824
    %v827 = vmul.f32 %v792, %v825
    %vm828 = vcmp.gt.s32.totalorder %v209, 3
    %v829 = vsel %vm828, 1, 0
    %v830 = vcvt.s32.f32 %v829
    %vm831 = vcmp.gt.s32.totalorder %v209, 4
    %v832 = vsel %vm831, 1, 0
    %v833 = vcvt.s32.f32 %v832
    %835 = vset.pattern.permute.xlu0 0
    %836 = vperm.xlu0 %835, %v833
    %v837 = vpop.permute.xlu0 %836
    %v839 = vmul.f32 %v837, %v827
    %v840 = vmul.f32 %v837, %v821
    %842 = vset.pattern.permute.xlu0 0
    %843 = vperm.xlu0 %842, %v830
    %v844 = vpop.permute.xlu0 %843
    %v846 = vmul.f32 %v844, %v810
    %v847 = vadd.f32 %v690, %v846
    %v848 = vadd.f32 %v847, %v839
    %850 = vrot.lane.b32.xlu0 %v810, 32
    %v851 = vpop.permute.xlu0 %850
    %854 = vrot.lane.b32.xlu0 %v839, 64
    %v855 = vpop.permute.xlu0 %854
    %v857 = vsel %vm55, %v851, %v855
    %v859 = vsel %vm226, %v857, 0
    %861 = vmatprep.subr.mxu0 %v211
    %862 = vmatpush1.msra.mxu0 %v210
    %863 = vmatprep.subr.mxu0 %v213
    %864 = vmatpush1.msra.mxu0 %v212
    %865 = vmatprep.subr.mxu0 %v215
    %866 = vmatpush1.msra.mxu0 %v214
    %867 = vmatprep.subr.mxu0 %v217
    %868 = vmatpush1.msra.mxu0 %v216
    %869 = vmatprep.subr.mxu0 %v219
    %870 = vmatpush1.msra.mxu0 %v218
    %871 = vmatprep.subr.mxu0 %v221
    %872 = vmatpush1.msra.mxu0 %v220
    %873 = vmatprep.subr.mxu0 %v223
    %874 = vmatpush1.msra.mxu0 %v222
    %875 = vmatprep.subr.mxu0 %v225
    %876 = vmatpush1.msra.mxu0 %v224
    %877 = vmatprep.subr.mxu0 0.0
    %878 = vmatpush1.msra.mxu0 0.0
    %879 = vmatprep.subr.mxu0 0.0
    %880 = vmatpush1.msra.mxu0 0.0
    %881 = vmatprep.subr.mxu0 0.0
    %882 = vmatpush1.msra.mxu0 0.0
    %883 = vmatprep.subr.mxu0 0.0
    %884 = vmatpush1.msra.mxu0 0.0
    %885 = vmatprep.subr.mxu0 0.0
    %886 = vmatpush1.msra.mxu0 0.0
    %887 = vmatprep.subr.mxu0 0.0
    %888 = vmatpush1.msra.mxu0 0.0
    %889 = vmatprep.subr.mxu0 0.0
    %890 = vmatpush1.msra.mxu0 0.0
    %891 = vmatprep.subr.mxu0 0.0
    %892 = vmatpush1.msra.mxu0 0.0
    %893 = vmatprep.subr.mxu0 0.0
    %894 = vmatpush1.msra.mxu0 0.0
    %895 = vmatprep.subr.mxu0 0.0
    %896 = vmatpush1.msra.mxu0 0.0
    %897 = vmatprep.subr.mxu0 0.0
    %898 = vmatpush1.msra.mxu0 0.0
    %899 = vmatprep.subr.mxu0 0.0
    %900 = vmatpush1.msra.mxu0 0.0
    %901 = vmatprep.subr.mxu0 0.0
    %902 = vmatpush1.msra.mxu0 0.0
    %903 = vmatprep.subr.mxu0 0.0
    %904 = vmatpush1.msra.mxu0 0.0
    %905 = vmatprep.subr.mxu0 0.0
    %906 = vmatpush1.msra.mxu0 0.0
    %907 = vmatprep.subr.mxu0 0.0
    %908 = vmatpush1.msra.mxu0 0.0
    %909 = vmatprep.subr.mxu0 0.0
    %910 = vmatpush1.msra.mxu0 0.0
    %911 = vmatprep.subr.mxu0 0.0
    %912 = vmatpush1.msra.mxu0 0.0
    %913 = vmatprep.subr.mxu0 0.0
    %914 = vmatpush1.msra.mxu0 0.0
    %915 = vmatprep.subr.mxu0 0.0
    %916 = vmatpush1.msra.mxu0 0.0
    %917 = vmatprep.subr.mxu0 0.0
    %918 = vmatpush1.msra.mxu0 0.0
    %919 = vmatprep.subr.mxu0 0.0
    %920 = vmatpush1.msra.mxu0 0.0
    %921 = vmatprep.subr.mxu0 0.0
    %922 = vmatpush1.msra.mxu0 0.0
    %923 = vmatprep.subr.mxu0 0.0
    %924 = vmatpush1.msra.mxu0 0.0
    %925 = vmatprep.mubr.f32.mxu0 0.0
    %926 = vmatmul.mubr.f32.gmra.mrb[0].mxu0 %v859
    %v927 = vpop.f32.mrb[0].mxu0
    %v928 = vadd.f32 0.0, %v927
    %v929 = vpop.f32.mrb[0].mxu0
    %v930 = vadd.f32 0.0, %v929
    %931 = vdwg.mxu0
    %v932 = vld [vmem:[%s777] sm:$0xff]
    %v933 = vadd.f32 %v928, %v932
    %v934 = vld [vmem:[%s774 + $0x8] sm:$0xff]
    %v935 = vadd.f32 %v930, %v934
    %v936 = vxor.u32 %v933, 2147483648
    %v937 = vmul.f32 %v936, 1.442695
    %v938 = vpow.pop %v937
    %v939 = vadd.f32 %v938, 1.0
    %v940 = vrcp.pop %v939
    %v941 = vmul.f32 1.0, %v940
    %v942 = vtanh.pop %v933
    %v943 = vxor.u32 %v935, 2147483648
    %v944 = vmul.f32 %v943, 1.442695
    %v945 = vpow.pop %v944
    %v946 = vadd.f32 %v945, 1.0
    %v947 = vrcp.pop %v946
    %v948 = vmul.f32 1.0, %v947
    %v949 = vtanh.pop %v935
    %v950 = vmul.f32 %v941, %v804
    %952 = vrot.lane.b32.xlu0 %v942, 64
    %v953 = vpop.permute.xlu0 %952
    %v955 = vmul.f32 %v941, %v953
    %957 = vrot.lane.b32.xlu0 %v955, 32
    %v958 = vpop.permute.xlu0 %957
    %v960 = vadd.f32 %v950, %v958
    %v961 = vtanh.pop %v960
    %963 = vrot.lane.b32.xlu0 %v961, 64
    %v964 = vpop.permute.xlu0 %963
    %v966 = vmul.f32 %v941, %v964
    %v967 = vmul.f32 %v948, %v840
    %969 = vrot.lane.b32.xlu0 %v949, 64
    %v970 = vpop.permute.xlu0 %969
    %v972 = vmul.f32 %v948, %v970
    %974 = vrot.lane.b32.xlu0 %v972, 32
    %v975 = vpop.permute.xlu0 %974
    %v977 = vadd.f32 %v967, %v975
    %v978 = vtanh.pop %v977
    %980 = vrot.lane.b32.xlu0 %v978, 64
    %v981 = vpop.permute.xlu0 %980
    %v983 = vmul.f32 %v948, %v981
    %v984 = vmul.f32 %v844, %v983
    %v985 = vmul.f32 %v844, %v977
    %v986 = vmul.f32 %v837, %v966
    %v987 = vadd.f32 %v848, %v986
    %v988 = vadd.f32 %v987, %v984
    %990 = vrot.lane.b32.xlu0 %v966, 32
    %v991 = vpop.permute.xlu0 %990
    %994 = vrot.lane.b32.xlu0 %v984, 64
    %v995 = vpop.permute.xlu0 %994
    %v997 = vsel %vm55, %v991, %v995
    %v999 = vsel %vm226, %v997, 0
    %1001 = vmatprep.subr.mxu0 %v211
    %1002 = vmatpush1.msra.mxu0 %v210
    %1003 = vmatprep.subr.mxu0 %v213
    %1004 = vmatpush1.msra.mxu0 %v212
    %1005 = vmatprep.subr.mxu0 %v215
    %1006 = vmatpush1.msra.mxu0 %v214
    %1007 = vmatprep.subr.mxu0 %v217
    %1008 = vmatpush1.msra.mxu0 %v216
    %1009 = vmatprep.subr.mxu0 %v219
    %1010 = vmatpush1.msra.mxu0 %v218
    %1011 = vmatprep.subr.mxu0 %v221
    %1012 = vmatpush1.msra.mxu0 %v220
    %1013 = vmatprep.subr.mxu0 %v223
    %1014 = vmatpush1.msra.mxu0 %v222
    %1015 = vmatprep.subr.mxu0 %v225
    %1016 = vmatpush1.msra.mxu0 %v224
    %1017 = vmatprep.subr.mxu0 0.0
    %1018 = vmatpush1.msra.mxu0 0.0
    %1019 = vmatprep.subr.mxu0 0.0
    %1020 = vmatpush1.msra.mxu0 0.0
    %1021 = vmatprep.subr.mxu0 0.0
    %1022 = vmatpush1.msra.mxu0 0.0
    %1023 = vmatprep.subr.mxu0 0.0
    %1024 = vmatpush1.msra.mxu0 0.0
    %1025 = vmatprep.subr.mxu0 0.0
    %1026 = vmatpush1.msra.mxu0 0.0
    %1027 = vmatprep.subr.mxu0 0.0
    %1028 = vmatpush1.msra.mxu0 0.0
    %1029 = vmatprep.subr.mxu0 0.0
    %1030 = vmatpush1.msra.mxu0 0.0
    %1031 = vmatprep.subr.mxu0 0.0
    %1032 = vmatpush1.msra.mxu0 0.0
    %1033 = vmatprep.subr.mxu0 0.0
    %1034 = vmatpush1.msra.mxu0 0.0
    %1035 = vmatprep.subr.mxu0 0.0
    %1036 = vmatpush1.msra.mxu0 0.0
    %1037 = vmatprep.subr.mxu0 0.0
    %1038 = vmatpush1.msra.mxu0 0.0
    %1039 = vmatprep.subr.mxu0 0.0
    %1040 = vmatpush1.msra.mxu0 0.0
    %1041 = vmatprep.subr.mxu0 0.0
    %1042 = vmatpush1.msra.mxu0 0.0
    %1043 = vmatprep.subr.mxu0 0.0
    %1044 = vmatpush1.msra.mxu0 0.0
    %1045 = vmatprep.subr.mxu0 0.0
    %1046 = vmatpush1.msra.mxu0 0.0
    %1047 = vmatprep.subr.mxu0 0.0
    %1048 = vmatpush1.msra.mxu0 0.0
    %1049 = vmatprep.subr.mxu0 0.0
    %1050 = vmatpush1.msra.mxu0 0.0
    %1051 = vmatprep.subr.mxu0 0.0
    %1052 = vmatpush1.msra.mxu0 0.0
    %1053 = vmatprep.subr.mxu0 0.0
    %1054 = vmatpush1.msra.mxu0 0.0
    %1055 = vmatprep.subr.mxu0 0.0
    %1056 = vmatpush1.msra.mxu0 0.0
    %1057 = vmatprep.subr.mxu0 0.0
    %1058 = vmatpush1.msra.mxu0 0.0
    %1059 = vmatprep.subr.mxu0 0.0
    %1060 = vmatpush1.msra.mxu0 0.0
    %1061 = vmatprep.subr.mxu0 0.0
    %1062 = vmatpush1.msra.mxu0 0.0
    %1063 = vmatprep.subr.mxu0 0.0
    %1064 = vmatpush1.msra.mxu0 0.0
    %1065 = vmatprep.mubr.f32.mxu0 0.0
    %1066 = vmatmul.mubr.f32.gmra.mrb[0].mxu0 %v999
    %v1067 = vpop.f32.mrb[0].mxu0
    %v1068 = vadd.f32 0.0, %v1067
    %v1069 = vpop.f32.mrb[0].mxu0
    %v1070 = vadd.f32 0.0, %v1069
    %1071 = vdwg.mxu0
    %v1072 = vld [vmem:[%s619] sm:$0xff]
    %v1073 = vadd.f32 %v1068, %v1072
    %v1074 = vld [vmem:[%s616 + $0x8] sm:$0xff]
    %v1075 = vadd.f32 %v1070, %v1074
    %v1076 = vxor.u32 %v1073, 2147483648
    %v1077 = vmul.f32 %v1076, 1.442695
    %v1078 = vpow.pop %v1077
    %v1079 = vadd.f32 %v1078, 1.0
    %v1080 = vrcp.pop %v1079
    %v1081 = vmul.f32 1.0, %v1080
    %v1082 = vtanh.pop %v1073
    %v1083 = vxor.u32 %v1075, 2147483648
    %v1084 = vmul.f32 %v1083, 1.442695
    %v1085 = vpow.pop %v1084
    %v1086 = vadd.f32 %v1085, 1.0
    %v1087 = vrcp.pop %v1086
    %v1088 = vmul.f32 1.0, %v1087
    %v1089 = vtanh.pop %v1075
    %v1090 = vmul.f32 %v1081, %v960
    %1092 = vrot.lane.b32.xlu0 %v1082, 64
    %v1093 = vpop.permute.xlu0 %1092
    %v1095 = vmul.f32 %v1081, %v1093
    %1097 = vrot.lane.b32.xlu0 %v1095, 32
    %v1098 = vpop.permute.xlu0 %1097
    %v1100 = vadd.f32 %v1090, %v1098
    %v1101 = vtanh.pop %v1100
    %1103 = vrot.lane.b32.xlu0 %v1101, 64
    %v1104 = vpop.permute.xlu0 %1103
    %v1106 = vmul.f32 %v1081, %v1104
    %v1107 = vmul.f32 %v1088, %v985
    %1109 = vrot.lane.b32.xlu0 %v1089, 64
    %v1110 = vpop.permute.xlu0 %1109
    %v1112 = vmul.f32 %v1088, %v1110
    %1114 = vrot.lane.b32.xlu0 %v1112, 32
    %v1115 = vpop.permute.xlu0 %1114
    %v1117 = vadd.f32 %v1107, %v1115
    %v1118 = vtanh.pop %v1117
    %1120 = vrot.lane.b32.xlu0 %v1118, 64
    %v1121 = vpop.permute.xlu0 %1120
    %v1123 = vmul.f32 %v1088, %v1121
    %v1124 = vmul.f32 %v686, %v1123
    %v1125 = vmul.f32 %v686, %v1117
    %v1126 = vmul.f32 %v679, %v1106
    %v1127 = vadd.f32 %v988, %v1126
    %v1128 = vadd.f32 %v1127, %v1124
    %1130 = vrot.lane.b32.xlu0 %v1106, 32
    %v1131 = vpop.permute.xlu0 %1130
    %1134 = vrot.lane.b32.xlu0 %v1124, 64
    %v1135 = vpop.permute.xlu0 %1134
    %v1137 = vsel %vm55, %v1131, %v1135
    %v1139 = vsel %vm226, %v1137, 0
    %1141 = vmatprep.subr.mxu0 %v211
    %1142 = vmatpush1.msra.mxu0 %v210
    %1143 = vmatprep.subr.mxu0 %v213
    %1144 = vmatpush1.msra.mxu0 %v212
    %1145 = vmatprep.subr.mxu0 %v215
    %1146 = vmatpush1.msra.mxu0 %v214
    %1147 = vmatprep.subr.mxu0 %v217
    %1148 = vmatpush1.msra.mxu0 %v216
    %1149 = vmatprep.subr.mxu0 %v219
    %1150 = vmatpush1.msra.mxu0 %v218
    %1151 = vmatprep.subr.mxu0 %v221
    %1152 = vmatpush1.msra.mxu0 %v220
    %1153 = vmatprep.subr.mxu0 %v223
    %1154 = vmatpush1.msra.mxu0 %v222
    %1155 = vmatprep.subr.mxu0 %v225
    %1156 = vmatpush1.msra.mxu0 %v224
    %1157 = vmatprep.subr.mxu0 0.0
    %1158 = vmatpush1.msra.mxu0 0.0
    %1159 = vmatprep.subr.mxu0 0.0
    %1160 = vmatpush1.msra.mxu0 0.0
    %1161 = vmatprep.subr.mxu0 0.0
    %1162 = vmatpush1.msra.mxu0 0.0
    %1163 = vmatprep.subr.mxu0 0.0
    %1164 = vmatpush1.msra.mxu0 0.0
    %1165 = vmatprep.subr.mxu0 0.0
    %1166 = vmatpush1.msra.mxu0 0.0
    %1167 = vmatprep.subr.mxu0 0.0
    %1168 = vmatpush1.msra.mxu0 0.0
    %1169 = vmatprep.subr.mxu0 0.0
    %1170 = vmatpush1.msra.mxu0 0.0
    %1171 = vmatprep.subr.mxu0 0.0
    %1172 = vmatpush1.msra.mxu0 0.0
    %1173 = vmatprep.subr.mxu0 0.0
    %1174 = vmatpush1.msra.mxu0 0.0
    %1175 = vmatprep.subr.mxu0 0.0
    %1176 = vmatpush1.msra.mxu0 0.0
    %1177 = vmatprep.subr.mxu0 0.0
    %1178 = vmatpush1.msra.mxu0 0.0
    %1179 = vmatprep.subr.mxu0 0.0
    %1180 = vmatpush1.msra.mxu0 0.0
    %1181 = vmatprep.subr.mxu0 0.0
    %1182 = vmatpush1.msra.mxu0 0.0
    %1183 = vmatprep.subr.mxu0 0.0
    %1184 = vmatpush1.msra.mxu0 0.0
    %1185 = vmatprep.subr.mxu0 0.0
    %1186 = vmatpush1.msra.mxu0 0.0
    %1187 = vmatprep.subr.mxu0 0.0
    %1188 = vmatpush1.msra.mxu0 0.0
    %1189 = vmatprep.subr.mxu0 0.0
    %1190 = vmatpush1.msra.mxu0 0.0
    %1191 = vmatprep.subr.mxu0 0.0
    %1192 = vmatpush1.msra.mxu0 0.0
    %1193 = vmatprep.subr.mxu0 0.0
    %1194 = vmatpush1.msra.mxu0 0.0
    %1195 = vmatprep.subr.mxu0 0.0
    %1196 = vmatpush1.msra.mxu0 0.0
    %1197 = vmatprep.subr.mxu0 0.0
    %1198 = vmatpush1.msra.mxu0 0.0
    %1199 = vmatprep.subr.mxu0 0.0
    %1200 = vmatpush1.msra.mxu0 0.0
    %1201 = vmatprep.subr.mxu0 0.0
    %1202 = vmatpush1.msra.mxu0 0.0
    %1203 = vmatprep.subr.mxu0 0.0
    %1204 = vmatpush1.msra.mxu0 0.0
    %1205 = vmatprep.mubr.f32.mxu0 0.0
    %1206 = vmatmul.mubr.f32.gmra.mrb[0].mxu0 %v1139
    %v1207 = vpop.f32.mrb[0].mxu0
    %v1208 = vadd.f32 0.0, %v1207
    %v1209 = vpop.f32.mrb[0].mxu0
    %v1210 = vadd.f32 0.0, %v1209
    %1211 = vdwg.mxu0
    %v1212 = vld [vmem:[%s461] sm:$0xff]
    %v1213 = vadd.f32 %v1208, %v1212
    %v1214 = vld [vmem:[%s458 + $0x8] sm:$0xff]
    %v1215 = vadd.f32 %v1210, %v1214
    %v1216 = vxor.u32 %v1213, 2147483648
    %v1217 = vmul.f32 %v1216, 1.442695
    %v1218 = vpow.pop %v1217
    %v1219 = vadd.f32 %v1218, 1.0
    %v1220 = vrcp.pop %v1219
    %v1221 = vmul.f32 1.0, %v1220
    %v1222 = vtanh.pop %v1213
    %v1223 = vxor.u32 %v1215, 2147483648
    %v1224 = vmul.f32 %v1223, 1.442695
    %v1225 = vpow.pop %v1224
    %v1226 = vadd.f32 %v1225, 1.0
    %v1227 = vrcp.pop %v1226
    %v1228 = vmul.f32 1.0, %v1227
    %v1229 = vtanh.pop %v1215
    %v1230 = vmul.f32 %v1221, %v1100
    %1232 = vrot.lane.b32.xlu0 %v1222, 64
    %v1233 = vpop.permute.xlu0 %1232
    %v1235 = vmul.f32 %v1221, %v1233
    %1237 = vrot.lane.b32.xlu0 %v1235, 32
    %v1238 = vpop.permute.xlu0 %1237
    %v1240 = vadd.f32 %v1230, %v1238
    %v1241 = vtanh.pop %v1240
    %1243 = vrot.lane.b32.xlu0 %v1241, 64
    %v1244 = vpop.permute.xlu0 %1243
    %v1246 = vmul.f32 %v1221, %v1244
    %v1247 = vmul.f32 %v1228, %v1125
    %1249 = vrot.lane.b32.xlu0 %v1229, 64
    %v1250 = vpop.permute.xlu0 %1249
    %v1252 = vmul.f32 %v1228, %v1250
    %1254 = vrot.lane.b32.xlu0 %v1252, 32
    %v1255 = vpop.permute.xlu0 %1254
    %v1257 = vadd.f32 %v1247, %v1255
    %v1258 = vtanh.pop %v1257
    %1260 = vrot.lane.b32.xlu0 %v1258, 64
    %v1261 = vpop.permute.xlu0 %1260
    %v1263 = vmul.f32 %v1228, %v1261
    %v1264 = vmul.f32 %v528, %v1263
    %v1265 = vmul.f32 %v528, %v1257
    %v1266 = vmul.f32 %v521, %v1246
    %v1267 = vadd.f32 %v1128, %v1266
    %v1268 = vadd.f32 %v1267, %v1264
    %1270 = vrot.lane.b32.xlu0 %v1246, 32
    %v1271 = vpop.permute.xlu0 %1270
    %1274 = vrot.lane.b32.xlu0 %v1264, 64
    %v1275 = vpop.permute.xlu0 %1274
    %v1277 = vsel %vm55, %v1271, %v1275
    %v1279 = vsel %vm226, %v1277, 0
    %1281 = vmatprep.subr.mxu0 %v211
    %1282 = vmatpush1.msra.mxu0 %v210
    %1283 = vmatprep.subr.mxu0 %v213
    %1284 = vmatpush1.msra.mxu0 %v212
    %1285 = vmatprep.subr.mxu0 %v215
    %1286 = vmatpush1.msra.mxu0 %v214
    %1287 = vmatprep.subr.mxu0 %v217
    %1288 = vmatpush1.msra.mxu0 %v216
    %1289 = vmatprep.subr.mxu0 %v219
    %1290 = vmatpush1.msra.mxu0 %v218
    %1291 = vmatprep.subr.mxu0 %v221
    %1292 = vmatpush1.msra.mxu0 %v220
    %1293 = vmatprep.subr.mxu0 %v223
    %1294 = vmatpush1.msra.mxu0 %v222
    %1295 = vmatprep.subr.mxu0 %v225
    %1296 = vmatpush1.msra.mxu0 %v224
    %1297 = vmatprep.subr.mxu0 0.0
    %1298 = vmatpush1.msra.mxu0 0.0
    %1299 = vmatprep.subr.mxu0 0.0
    %1300 = vmatpush1.msra.mxu0 0.0
    %1301 = vmatprep.subr.mxu0 0.0
    %1302 = vmatpush1.msra.mxu0 0.0
    %1303 = vmatprep.subr.mxu0 0.0
    %1304 = vmatpush1.msra.mxu0 0.0
    %1305 = vmatprep.subr.mxu0 0.0
    %1306 = vmatpush1.msra.mxu0 0.0
    %1307 = vmatprep.subr.mxu0 0.0
    %1308 = vmatpush1.msra.mxu0 0.0
    %1309 = vmatprep.subr.mxu0 0.0
    %1310 = vmatpush1.msra.mxu0 0.0
    %1311 = vmatprep.subr.mxu0 0.0
    %1312 = vmatpush1.msra.mxu0 0.0
    %1313 = vmatprep.subr.mxu0 0.0
    %1314 = vmatpush1.msra.mxu0 0.0
    %1315 = vmatprep.subr.mxu0 0.0
    %1316 = vmatpush1.msra.mxu0 0.0
    %1317 = vmatprep.subr.mxu0 0.0
    %1318 = vmatpush1.msra.mxu0 0.0
    %1319 = vmatprep.subr.mxu0 0.0
    %1320 = vmatpush1.msra.mxu0 0.0
    %1321 = vmatprep.subr.mxu0 0.0
    %1322 = vmatpush1.msra.mxu0 0.0
    %1323 = vmatprep.subr.mxu0 0.0
    %1324 = vmatpush1.msra.mxu0 0.0
    %1325 = vmatprep.subr.mxu0 0.0
    %1326 = vmatpush1.msra.mxu0 0.0
    %1327 = vmatprep.subr.mxu0 0.0
    %1328 = vmatpush1.msra.mxu0 0.0
    %1329 = vmatprep.subr.mxu0 0.0
    %1330 = vmatpush1.msra.mxu0 0.0
    %1331 = vmatprep.subr.mxu0 0.0
    %1332 = vmatpush1.msra.mxu0 0.0
    %1333 = vmatprep.subr.mxu0 0.0
    %1334 = vmatpush1.msra.mxu0 0.0
    %1335 = vmatprep.subr.mxu0 0.0
    %1336 = vmatpush1.msra.mxu0 0.0
    %1337 = vmatprep.subr.mxu0 0.0
    %1338 = vmatpush1.msra.mxu0 0.0
    %1339 = vmatprep.subr.mxu0 0.0
    %1340 = vmatpush1.msra.mxu0 0.0
    %1341 = vmatprep.subr.mxu0 0.0
    %1342 = vmatpush1.msra.mxu0 0.0
    %1343 = vmatprep.subr.mxu0 0.0
    %1344 = vmatpush1.msra.mxu0 0.0
    %1345 = vmatprep.mubr.f32.mxu0 0.0
    %1346 = vmatmul.mubr.f32.gmra.mrb[0].mxu0 %v1279
    %v1347 = vpop.f32.mrb[0].mxu0
    %v1348 = vadd.f32 0.0, %v1347
    %v1349 = vpop.f32.mrb[0].mxu0
    %v1350 = vadd.f32 0.0, %v1349
    %1351 = vdwg.mxu0
    %v1352 = vld [vmem:[%s303] sm:$0xff]
    %v1353 = vadd.f32 %v1348, %v1352
    %v1354 = vld [vmem:[#allocation2 + $0x8] sm:$0xff]
    %v1355 = vadd.f32 %v1350, %v1354
    %v1356 = vxor.u32 %v1353, 2147483648
    %v1357 = vmul.f32 %v1356, 1.442695
    %v1358 = vpow.pop %v1357
    %v1359 = vadd.f32 %v1358, 1.0
    %v1360 = vrcp.pop %v1359
    %v1361 = vmul.f32 1.0, %v1360
    %v1362 = vtanh.pop %v1353
    %v1363 = vxor.u32 %v1355, 2147483648
    %v1364 = vmul.f32 %v1363, 1.442695
    %v1365 = vpow.pop %v1364
    %v1366 = vadd.f32 %v1365, 1.0
    %v1367 = vrcp.pop %v1366
    %v1368 = vmul.f32 1.0, %v1367
    %v1369 = vtanh.pop %v1355
    %v1370 = vmul.f32 %v1361, %v1240
    %1372 = vrot.lane.b32.xlu0 %v1362, 64
    %v1373 = vpop.permute.xlu0 %1372
    %v1375 = vmul.f32 %v1361, %v1373
    %1377 = vrot.lane.b32.xlu0 %v1375, 32
    %v1378 = vpop.permute.xlu0 %1377
    %v1380 = vadd.f32 %v1370, %v1378
    %v1381 = vtanh.pop %v1380
    %1383 = vrot.lane.b32.xlu0 %v1381, 64
    %v1384 = vpop.permute.xlu0 %1383
    %v1386 = vmul.f32 %v1361, %v1384
    %v1387 = vmul.f32 %v1368, %v1265
    %1389 = vrot.lane.b32.xlu0 %v1369, 64
    %v1390 = vpop.permute.xlu0 %1389
    %v1392 = vmul.f32 %v1368, %v1390
    %1394 = vrot.lane.b32.xlu0 %v1392, 32
    %v1395 = vpop.permute.xlu0 %1394
    %v1397 = vadd.f32 %v1387, %v1395
    %v1398 = vtanh.pop %v1397
    %1400 = vrot.lane.b32.xlu0 %v1398, 64
    %v1401 = vpop.permute.xlu0 %1400
    %v1403 = vmul.f32 %v1368, %v1401
    %v1404 = vmul.f32 %v370, %v1403
    %v1405 = vmul.f32 %v363, %v1386
    %v1406 = vadd.f32 %v1268, %v1405
    %v1407 = vadd.f32 %v1406, %v1404
    %v1408 = vcvt.s32.f32 %v209
    %v1409 = vmax.f32 %v1408, 1.0
    %1411 = vset.pattern.permute.xlu0 0
    %1412 = vperm.xlu0 %1411, %v1409
    %v1413 = vpop.permute.xlu0 %1412
    %v1415 = vrcp.pop %v1413
    %v1416 = vmul.f32 %v1407, %v1415
    %v1417 = vld [vmem:[%s5] sm:$0xff]
    %v1418 = vld [vmem:[%s5 + $0x8] sm:$0xff]
    %v1419 = vld [vmem:[%s5 + $0x10] sm:$0xff]
    %v1420 = vld [vmem:[%s5 + $0x18] sm:$0xff]
    %v1421 = vld [vmem:[%s6] sm:$0x1]
    %v1423 = vlaneseq
    %v1424 = vshrl.u32 %v1423, 7
    %v1425 = vsub.s32 0, %v1424
    %v1426 = vrot.slane %v1421, %v1425
    %1429 = vrot.lane.b32.xlu0 %v1416, 32
    %v1430 = vpop.permute.xlu0 %1429
    %v1431 = vsel %vm55, %v1430, 0
    %1433 = vmatprep.subr.mxu0 0.0
    %1434 = vmatpush1.msra.mxu0 %v1417
    %1435 = vmatprep.subr.mxu0 0.0
    %1436 = vmatpush1.msra.mxu0 %v1418
    %1437 = vmatprep.subr.mxu0 0.0
    %1438 = vmatpush1.msra.mxu0 %v1419
    %1439 = vmatprep.subr.mxu0 0.0
    %1440 = vmatpush1.msra.mxu0 %v1420
    %1441 = vmatprep.subr.mxu0 0.0
    %1442 = vmatpush1.msra.mxu0 0.0
    %1443 = vmatprep.subr.mxu0 0.0
    %1444 = vmatpush1.msra.mxu0 0.0
    %1445 = vmatprep.subr.mxu0 0.0
    %1446 = vmatpush1.msra.mxu0 0.0
    %1447 = vmatprep.subr.mxu0 0.0
    %1448 = vmatpush1.msra.mxu0 0.0
    %1449 = vmatprep.subr.mxu0 0.0
    %1450 = vmatpush1.msra.mxu0 0.0
    %1451 = vmatprep.subr.mxu0 0.0
    %1452 = vmatpush1.msra.mxu0 0.0
    %1453 = vmatprep.subr.mxu0 0.0
    %1454 = vmatpush1.msra.mxu0 0.0
    %1455 = vmatprep.subr.mxu0 0.0
    %1456 = vmatpush1.msra.mxu0 0.0
    %1457 = vmatprep.subr.mxu0 0.0
    %1458 = vmatpush1.msra.mxu0 0.0
    %1459 = vmatprep.subr.mxu0 0.0
    %1460 = vmatpush1.msra.mxu0 0.0
    %1461 = vmatprep.subr.mxu0 0.0
    %1462 = vmatpush1.msra.mxu0 0.0
    %1463 = vmatprep.subr.mxu0 0.0
    %1464 = vmatpush1.msra.mxu0 0.0
    %1465 = vmatprep.subr.mxu0 0.0
    %1466 = vmatpush1.msra.mxu0 0.0
    %1467 = vmatprep.subr.mxu0 0.0
    %1468 = vmatpush1.msra.mxu0 0.0
    %1469 = vmatprep.subr.mxu0 0.0
    %1470 = vmatpush1.msra.mxu0 0.0
    %1471 = vmatprep.subr.mxu0 0.0
    %1472 = vmatpush1.msra.mxu0 0.0
    %1473 = vmatprep.subr.mxu0 0.0
    %1474 = vmatpush1.msra.mxu0 0.0
    %1475 = vmatprep.subr.mxu0 0.0
    %1476 = vmatpush1.msra.mxu0 0.0
    %1477 = vmatprep.subr.mxu0 0.0
    %1478 = vmatpush1.msra.mxu0 0.0
    %1479 = vmatprep.subr.mxu0 0.0
    %1480 = vmatpush1.msra.mxu0 0.0
    %1481 = vmatprep.subr.mxu0 0.0
    %1482 = vmatpush1.msra.mxu0 0.0
    %1483 = vmatprep.subr.mxu0 0.0
    %1484 = vmatpush1.msra.mxu0 0.0
    %1485 = vmatprep.subr.mxu0 0.0
    %1486 = vmatpush1.msra.mxu0 0.0
    %1487 = vmatprep.subr.mxu0 0.0
    %1488 = vmatpush1.msra.mxu0 0.0
    %1489 = vmatprep.subr.mxu0 0.0
    %1490 = vmatpush1.msra.mxu0 0.0
    %1491 = vmatprep.subr.mxu0 0.0
    %1492 = vmatpush1.msra.mxu0 0.0
    %1493 = vmatprep.subr.mxu0 0.0
    %1494 = vmatpush1.msra.mxu0 0.0
    %1495 = vmatprep.subr.mxu0 0.0
    %1496 = vmatpush1.msra.mxu0 0.0
    %1497 = vmatprep.mubr.f32.mxu0 0.0
    %1498 = vmatmul.mubr.f32.gmra.mrb[0].mxu0 %v1431
    %v1499 = vpop.f32.mrb[0].mxu0
    %v1500 = vadd.f32 %v1426, %v1499
    %v1501 = vpop.f32.mrb[0].mxu0
    %1502 = vdwg.mxu0
    %1503 = vst [vmem:[#allocation3] sm:$0xff] %v1500
    // Predicated region
    $region30: #{rnn_forward.1} parent=1 // pred_check
      _
    $region31: #{rnn_forward.1} parent=1 // pred_check_branch
      %1505 = sbr.rel (0) target = $region33
    $region32: #{rnn_forward.1} parent=1 // pred_region
      %s1507 = ssub.s32 128, 128
      %1508 = vsyncadd [#allocation4], %s1507
      %s1510 = sshll.u32 [#allocation3], 4
      %s1511 = int_to_ptr.vmem [resolvable:$true] %s1510
      %1513 = dma.vmem_to_hbm [thread:$0]  %s1511, 128, %s7, [#allocation4]
    $region33: #{rnn_forward.1} parent=1 // pred_fallthru
      _
    // Predicated region
    $region34: #{rnn_forward.1} parent=1 // pred_check
      _
    $region35: #{rnn_forward.1} parent=1 // pred_check_branch
      %1515 = sbr.rel (0) target = $region37
    $region36: #{rnn_forward.1} parent=1 // pred_region
      %1516 = dma.done [#allocation4], 128
    $region37: #{rnn_forward.1} parent=1 // pred_fallthru
      _
    %1517 = vsyncpa [#allocation4], 1

</llo_original>
